<compile_context>
chip_gen: v7x
topology: tpu7x:2x2x1
jax: 0.10.0
libtpu: 0.0.40
codegen_flags: <defaults>
</compile_context>

<pallas_src>
import functools
import math

import jax
import jax.numpy as jnp
import numpy as np
from jax import lax
from jax.experimental import pallas as pl
from jax.experimental.pallas import tpu as pltpu

NEG = 1e12  # magnitude of the '-inf' constant used by the PyTorch reference


def _round_up(x, m):
    return (x + m - 1) // m * m


# --------------------------------------------------------------------------- #
# Pallas kernel: one (th, tm, Np) logits block per grid step.
# --------------------------------------------------------------------------- #
def _egp_kernel(q_ref, kT_ref, bstart_ref, bend_ref, mm_ref, mn_ref, out_ref,
                *, th, tm, h_tiles, inv_sqrt_d, out_dtype):
    mi = pl.program_id(2)

    # (tm, D) x (D, Np) -> (tm, Np) similarity for this m-tile.
    sim = jnp.dot(q_ref[0], kT_ref[0],
                  preferred_element_type=jnp.float32) * inv_sqrt_d
    n_lanes = sim.shape[-1]

    mm = mm_ref[0]                                       # (tm, 1)  row mask
    mn = mn_ref[0]                                       # (1, Np)  col mask

    r0 = mi * tm
    row = lax.broadcasted_iota(jnp.int32, (tm, n_lanes), 0) + r0
    col = lax.broadcasted_iota(jnp.int32, (tm, n_lanes), 1)
    tril = (row > col).astype(jnp.float32)               # strict lower triangle

    # Head-independent mask + tril math (exactly equal to the reference's
    # three sequential masking steps):
    #   logits = x*mm*mn + (-NEG)*((1-mm)*mn + (1-mn)) - NEG*tril
    mult = mm * mn                                       # (tm, Np)
    addv = (-NEG) * ((1.0 - mm) * mn + (1.0 - mn)) - NEG * tril
    masked_sim = sim * mult + addv                       # hoisted out of head loop

    # Static head offset when there is no head split (common case).
    base = 0 if h_tiles == 1 else pl.program_id(1) * th

    for h in range(th):                                  # static unroll
        hg = base + h
        bs_row = bstart_ref[0, pl.ds(hg, 1), :]          # (1, Np)  start bias
        be_col = bend_ref[0, :, pl.ds(hg, 1)]            # (tm, 1)  end bias
        out_ref[0, h] = (masked_sim + (bs_row + be_col) * mult).astype(out_dtype)


# --------------------------------------------------------------------------- #
# Generation-aware VMEM budget and tile selection.
# --------------------------------------------------------------------------- #
def _vmem_budget_bytes():
    cap = 64 * 2**20                       # conservative default (v7x per-core)
    try:
        info = pltpu.get_tpu_info()
        cap = int(getattr(info, "vmem_capacity_bytes", cap)) or cap
    except Exception:
        pass
    # ~75% of physical VMEM, always leaving >= 8 MiB headroom.
    return max(24 * 2**20, min((cap * 3) // 4, cap - 8 * 2**20))


def _choose_tiles(Np, heads, D, out_bytes, budget):
    head_divs = [d for d in range(heads, 0, -1) if heads % d == 0]
    tm_all = [c for c in (1024, 512, 256, 128, 64, 32, 16, 8)
              if c <= Np and Np % c == 0]

    def est(tm, th):
        blocks = 2 * (th * tm * Np * out_bytes    # output block (double buffered)
                      + tm * D * 4                # q tile
                      + D * Np * 4                # k^T (full seq)
                      + heads * Np * 4            # start bias (full heads)
                      + tm * heads * 4            # end bias tile
                      + tm * 4 + Np * 4)          # masks
        temps = 8 * tm * Np * 4                   # sim/mult/addv/masked_sim/iotas/...
        return blocks + temps + (2 << 20)

    # Pass 1: keep tm >= 128; prefer full heads, then the largest feasible tm;
    # split heads before shrinking tm below 128 (v7x 64 MiB guidance).
    for th in head_divs:
        for tm in [c for c in tm_all if c >= 128]:
            if est(tm, th) <= budget:
                return tm, th
    # Pass 2: last resort — tm below 128 (still a multiple of 8).
    for th in head_divs:
        for tm in [c for c in tm_all if c < 128]:
            if est(tm, th) <= budget:
                return tm, th
    return tm_all[-1], 1


# --------------------------------------------------------------------------- #
# XLA pre-pass: linear_1, RoPE, linear_2 bias terms (O(N*H*D), negligible).
# --------------------------------------------------------------------------- #
def _prepass(x, mask, W1, b1, W2, b2, heads, head_size, Np):
    B, N, _ = x.shape
    D = head_size
    xf = x.astype(jnp.float32)
    h0 = xf @ W1.astype(jnp.float32) + b1.astype(jnp.float32)       # (B, N, 2D)
    qw = h0[..., 0::2]
    kw = h0[..., 1::2]

    # SinusoidalPositionEmbedding(head_size, 'zero') + torch .repeat(1,1,2) tiling.
    pos = jnp.arange(N, dtype=jnp.float32)
    inv = jnp.power(10000.0, -2.0 * jnp.arange(D // 2, dtype=jnp.float32) / D)
    ang = pos[:, None] * inv[None, :]                               # (N, D/2)
    cos_pos = jnp.tile(jnp.cos(ang), (1, 2))[None]                  # (1, N, D)
    sin_pos = jnp.tile(jnp.sin(ang), (1, 2))[None]

    def rope(v):
        v2 = jnp.stack([-v[..., 1::2], v[..., 0::2]], axis=-1).reshape(v.shape)
        return v * cos_pos + v2 * sin_pos

    qr = rope(qw)                                                   # (B, N, D)
    kr = rope(kw)

    bias = (h0 @ W2.astype(jnp.float32) + b2.astype(jnp.float32)) * 0.5
    bstart = jnp.transpose(bias[..., 0::2], (0, 2, 1))              # (B, heads, N)
    bend = bias[..., 1::2]                                          # (B, N, heads)

    mf = mask.astype(jnp.float32)
    pn = Np - N
    qr_p = jnp.pad(qr, ((0, 0), (0, pn), (0, 0)))                   # (B, Np, D)
    krT_p = jnp.pad(jnp.transpose(kr, (0, 2, 1)),
                    ((0, 0), (0, 0), (0, pn)))                      # (B, D, Np)
    bstart_p = jnp.pad(bstart, ((0, 0), (0, 0), (0, pn)))           # (B, heads, Np)
    bend_p = jnp.pad(bend, ((0, 0), (0, pn), (0, 0)))               # (B, Np, heads)
    m_pad = jnp.pad(mf, ((0, 0), (0, pn)))
    mask_m = m_pad[:, :, None]                                      # (B, Np, 1)
    mask_n = m_pad[:, None, :]                                      # (B, 1, Np)
    return qr_p, krT_p, bstart_p, bend_p, mask_m, mask_n


# --------------------------------------------------------------------------- #
# Public wrapper.
# --------------------------------------------------------------------------- #
def efficient_global_pointer(x, mask, W1, b1, W2, b2, heads, head_size,
                             *, out_dtype=jnp.bfloat16, return_padded=False):
    """Pallas implementation of EfficientGlobalPointer.forward (RoPE=True)."""
    B, N, H = x.shape
    D = head_size
    assert W1.shape == (H, 2 * D) and W2.shape == (2 * D, 2 * heads)

    Np = max(128, _round_up(N, 128))                     # lane-dense sequence pad
    out_bytes = jnp.dtype(out_dtype).itemsize

    budget = _vmem_budget_bytes()
    tm, th = _choose_tiles(Np, heads, D, out_bytes, budget)
    m_tiles = Np // tm
    h_tiles = heads // th

    qr, krT, bstart, bend, mask_m, mask_n = _prepass(
        x, mask, W1, b1, W2, b2, heads, head_size, Np)

    grid_spec = pltpu.PrefetchScalarGridSpec(
        num_scalar_prefetch=0,
        grid=(B, h_tiles, m_tiles),
        in_specs=[
            pl.BlockSpec((1, tm, D), lambda b, hi, mi: (b, mi, 0)),       # q (RoPE'd)
            pl.BlockSpec((1, D, Np), lambda b, hi, mi: (b, 0, 0)),        # k^T (RoPE'd)
            pl.BlockSpec((1, heads, Np), lambda b, hi, mi: (b, 0, 0)),    # start bias
            pl.BlockSpec((1, tm, heads), lambda b, hi, mi: (b, mi, 0)),   # end bias
            pl.BlockSpec((1, tm, 1), lambda b, hi, mi: (b, mi, 0)),       # row mask
            pl.BlockSpec((1, 1, Np), lambda b, hi, mi: (b, 0, 0)),        # col mask
        ],
        out_specs=pl.BlockSpec((1, th, tm, Np), lambda b, hi, mi: (b, hi, mi, 0)),
    )

    kernel = functools.partial(
        _egp_kernel, th=th, tm=tm, h_tiles=h_tiles,
        inv_sqrt_d=1.0 / math.sqrt(D), out_dtype=out_dtype)

    out_full = pl.pallas_call(
        kernel,
        out_shape=jax.ShapeDtypeStruct((B, heads, Np, Np), out_dtype),
        grid_spec=grid_spec,
        compiler_params=pltpu.CompilerParams(
            dimension_semantics=("parallel", "parallel", "parallel"),
            vmem_limit_bytes=int(budget)),
    )(qr, krT, bstart, bend, mask_m, mask_n)

    if return_padded or Np == N:
        # No post-kernel slice copy (padded rows/cols carry ~-1e12, same as
        # fully-masked positions).
        return out_full
    # NOTE: this slice re-reads/re-writes the logits tensor when N % 128 != 0;
    # pass return_padded=True to let the consumer slice lazily instead.
    return out_full[:, :, :N, :N]


# --------------------------------------------------------------------------- #
# Pure-JAX reference (faithful transcription of the PyTorch forward).
# --------------------------------------------------------------------------- #
def ref_forward(x, mask, W1, b1, W2, b2, heads, head_size):
    B, N, _ = x.shape
    D = head_size
    h = x @ W1 + b1
    qw, kw = h[..., 0::2], h[..., 1::2]
    pos_ids = jnp.arange(N, dtype=jnp.float32)[None]
    indices = jnp.power(10000.0, -2.0 * jnp.arange(D // 2, dtype=jnp.float32) / D)
    emb = jnp.einsum('bn,d->bnd', pos_ids, indices)
    emb = jnp.stack([jnp.sin(emb), jnp.cos(emb)], axis=-1).reshape(-1, N, D)
    cos_pos = jnp.tile(emb[..., 1::2], (1, 1, 2))
    sin_pos = jnp.tile(emb[..., 0::2], (1, 1, 2))
    qw2 = jnp.stack([-qw[..., 1::2], qw[..., 0::2]], axis=3).reshape(qw.shape)
    qw = qw * cos_pos + qw2 * sin_pos
    kw2 = jnp.stack([-kw[..., 1::2], kw[..., 0::2]], axis=3).reshape(kw.shape)
    kw = kw * cos_pos + kw2 * sin_pos
    logits = jnp.einsum('bmd,bnd->bmn', qw, kw) / D ** 0.5
    bias = jnp.einsum('bnh->bhn', h @ W2 + b2) / 2
    logits = logits[:, None] + bias[:, 0::2, None] + bias[:, 1::2, :, None]
    m = mask.astype(logits.dtype)
    m_m = m[:, None, :, None]
    m_n = m[:, None, None, :]
    logits = logits * m_m + (-1e12) * (1 - m_m)
    logits = logits * m_n + (-1e12) * (1 - m_n)
    tril = jnp.tril(jnp.ones((N, N), logits.dtype), -1)
    logits = logits - tril * 1e12
    return logits


if __name__ == "__main__":
    B, N, H = 2, 16, 32
    heads, head_size = 4, 16

    key = jax.random.PRNGKey(0)
    k1, k2, k3, k4, k5 = jax.random.split(key, 5)
    x = jax.random.normal(k1, (B, N, H), dtype=jnp.float32)
    W1 = 0.1 * jax.random.normal(k2, (H, 2 * head_size), dtype=jnp.float32)
    b1 = 0.1 * jax.random.normal(k3, (2 * head_size,), dtype=jnp.float32)
    W2 = 0.1 * jax.random.normal(k4, (2 * head_size, 2 * heads), dtype=jnp.float32)
    b2 = 0.1 * jax.random.normal(k5, (2 * heads,), dtype=jnp.float32)
    # valid-token mask: last 3 positions padded
    mask = jnp.concatenate(
        [jnp.ones((B, N - 3), jnp.float32), jnp.zeros((B, 3), jnp.float32)], axis=1)

    ref = ref_forward(x, mask, W1, b1, W2, b2, heads, head_size)

    # f32 output: strict check against the reference.
    out_f32 = efficient_global_pointer(x, mask, W1, b1, W2, b2, heads, head_size,
                                       out_dtype=jnp.float32)
    out_f32 = jax.block_until_ready(out_f32)
    assert out_f32.shape == (B, heads, N, N)
    np.testing.assert_allclose(np.asarray(out_f32), np.asarray(ref),
                               rtol=1e-3, atol=1e-2)

    # Default bf16 output (halves HBM writeback): looser tolerance.
    out_bf16 = efficient_global_pointer(x, mask, W1, b1, W2, b2, heads, head_size)
    out_bf16 = jax.block_until_ready(out_bf16)
    assert out_bf16.dtype == jnp.bfloat16 and out_bf16.shape == (B, heads, N, N)
    np.testing.assert_allclose(np.asarray(out_bf16, dtype=np.float32),
                               np.asarray(ref), rtol=2e-2, atol=5e-2)

    print("KERNEL_OK")
</pallas_src>

<mosaic_0001>
module attributes {stable_mosaic.version = 11 : i64} {
  func.func @_egp_kernel(%arg0: i32, %arg1: i32, %arg2: i32, %arg3: memref<1x128x16xf32, #tpu.memory_space<vmem>>, %arg4: memref<1x16x128xf32, #tpu.memory_space<vmem>>, %arg5: memref<1x4x128xf32, #tpu.memory_space<vmem>>, %arg6: memref<1x128x4xf32, #tpu.memory_space<vmem>>, %arg7: memref<1x128x1xf32, #tpu.memory_space<vmem>>, %arg8: memref<1x1x128xf32, #tpu.memory_space<vmem>>, %arg9: memref<1x4x128x128xf32, #tpu.memory_space<vmem>>) attributes {dimension_semantics = [#tpu.dimension_semantics<parallel>, #tpu.dimension_semantics<parallel>, #tpu.dimension_semantics<parallel>], iteration_bounds = array<i64: 2, 1, 1>, scalar_prefetch = 0 : i64, scratch_operands = 0 : i64, tpu.core_type = #tpu.core_type<tc>, window_params = [{transform_indices = @transform_0, window_bounds = array<i64: 1, 128, 16>}, {transform_indices = @transform_1, window_bounds = array<i64: 1, 16, 128>}, {transform_indices = @transform_2, window_bounds = array<i64: 1, 4, 128>}, {transform_indices = @transform_3, window_bounds = array<i64: 1, 128, 4>}, {transform_indices = @transform_4, window_bounds = array<i64: 1, 128, 1>}, {transform_indices = @transform_5, window_bounds = array<i64: 1, 1, 128>}, {transform_indices = @transform_6, window_bounds = array<i64: 1, 4, 128, 128>}]} {
    %c0 = arith.constant 0 : index
    %c0_0 = arith.constant 0 : index
    %c0_1 = arith.constant 0 : index
    %0 = vector.load %arg3[%c0, %c0_0, %c0_1] : memref<1x128x16xf32, #tpu.memory_space<vmem>>, vector<1x128x16xf32>
    %1 = vector.shape_cast %0 : vector<1x128x16xf32> to vector<128x16xf32>
    %c0_2 = arith.constant 0 : index
    %c0_3 = arith.constant 0 : index
    %c0_4 = arith.constant 0 : index
    %2 = vector.load %arg4[%c0_2, %c0_3, %c0_4] : memref<1x16x128xf32, #tpu.memory_space<vmem>>, vector<1x16x128xf32>
    %3 = vector.shape_cast %2 : vector<1x16x128xf32> to vector<16x128xf32>
    %cst = arith.constant dense<0.000000e+00> : vector<128x128xf32>
    %4 = tpu.matmul %1, %3, %cst {dimension_numbers = #tpu.dot_dimension_numbers<[1], [0], [0], [1], [0, 0, 1, 1], [], []>} : vector<128x16xf32>, vector<16x128xf32>, vector<128x128xf32> -> vector<128x128xf32>
    %cst_5 = arith.constant 2.500000e-01 : f32
    %5 = vector.broadcast %cst_5 : f32 to vector<128x128xf32>
    %6 = arith.mulf %4, %5 : vector<128x128xf32>
    %c0_6 = arith.constant 0 : index
    %c0_7 = arith.constant 0 : index
    %c0_8 = arith.constant 0 : index
    %7 = vector.load %arg7[%c0_6, %c0_7, %c0_8] : memref<1x128x1xf32, #tpu.memory_space<vmem>>, vector<1x128x1xf32>
    %8 = vector.shape_cast %7 : vector<1x128x1xf32> to vector<128x1xf32>
    %c0_9 = arith.constant 0 : index
    %c0_10 = arith.constant 0 : index
    %c0_11 = arith.constant 0 : index
    %9 = vector.load %arg8[%c0_9, %c0_10, %c0_11] : memref<1x1x128xf32, #tpu.memory_space<vmem>>, vector<1x1x128xf32>
    %10 = vector.shape_cast %9 : vector<1x1x128xf32> to vector<1x128xf32>
    %c128_i32 = arith.constant 128 : i32
    %11 = arith.muli %arg2, %c128_i32 : i32
    %12 = tpu.iota {dimensions = array<i32: 0>} : vector<128x128xi32>
    %13 = vector.broadcast %11 : i32 to vector<128x128xi32>
    %14 = arith.addi %12, %13 : vector<128x128xi32>
    %15 = tpu.iota {dimensions = array<i32: 1>} : vector<128x128xi32>
    %16 = arith.cmpi sgt, %14, %15 : vector<128x128xi32>
    %17 = arith.extui %16 : vector<128x128xi1> to vector<128x128xi32>
    %18 = arith.sitofp %17 : vector<128x128xi32> to vector<128x128xf32>
    %19 = vector.broadcast %8 : vector<128x1xf32> to vector<128x128xf32>
    %20 = vector.broadcast %10 : vector<1x128xf32> to vector<128x128xf32>
    %21 = arith.mulf %19, %20 : vector<128x128xf32>
    %cst_12 = arith.constant 1.000000e+00 : f32
    %22 = vector.broadcast %cst_12 : f32 to vector<128x1xf32>
    %23 = arith.subf %22, %8 : vector<128x1xf32>
    %24 = vector.broadcast %23 : vector<128x1xf32> to vector<128x128xf32>
    %25 = vector.broadcast %10 : vector<1x128xf32> to vector<128x128xf32>
    %26 = arith.mulf %24, %25 : vector<128x128xf32>
    %cst_13 = arith.constant 1.000000e+00 : f32
    %27 = vector.broadcast %cst_13 : f32 to vector<1x128xf32>
    %28 = arith.subf %27, %10 : vector<1x128xf32>
    %29 = vector.broadcast %28 : vector<1x128xf32> to vector<128x128xf32>
    %30 = arith.addf %26, %29 : vector<128x128xf32>
    %cst_14 = arith.constant -9.99999995E+11 : f32
    %31 = vector.broadcast %cst_14 : f32 to vector<128x128xf32>
    %32 = arith.mulf %31, %30 : vector<128x128xf32>
    %cst_15 = arith.constant 9.99999995E+11 : f32
    %33 = vector.broadcast %cst_15 : f32 to vector<128x128xf32>
    %34 = arith.mulf %33, %18 : vector<128x128xf32>
    %35 = arith.subf %32, %34 : vector<128x128xf32>
    %36 = arith.mulf %6, %21 : vector<128x128xf32>
    %37 = arith.addf %36, %35 : vector<128x128xf32>
    %c0_16 = arith.constant 0 : index
    %c0_17 = arith.constant 0 : index
    %c0_18 = arith.constant 0 : index
    %38 = vector.load %arg5[%c0_16, %c0_17, %c0_18] : memref<1x4x128xf32, #tpu.memory_space<vmem>>, vector<1x1x128xf32>
    %39 = vector.shape_cast %38 : vector<1x1x128xf32> to vector<1x128xf32>
    %c0_19 = arith.constant 0 : index
    %c0_20 = arith.constant 0 : index
    %c0_21 = arith.constant 0 : index
    %40 = vector.load %arg6[%c0_19, %c0_20, %c0_21] : memref<1x128x4xf32, #tpu.memory_space<vmem>>, vector<1x128x1xf32>
    %41 = vector.shape_cast %40 : vector<1x128x1xf32> to vector<128x1xf32>
    %42 = vector.broadcast %39 : vector<1x128xf32> to vector<128x128xf32>
    %43 = vector.broadcast %41 : vector<128x1xf32> to vector<128x128xf32>
    %44 = arith.addf %42, %43 : vector<128x128xf32>
    %45 = arith.mulf %44, %21 : vector<128x128xf32>
    %46 = arith.addf %37, %45 : vector<128x128xf32>
    %c0_22 = arith.constant 0 : index
    %c0_23 = arith.constant 0 : index
    %c0_24 = arith.constant 0 : index
    %c0_25 = arith.constant 0 : index
    %47 = vector.load %arg9[%c0_22, %c0_23, %c0_24, %c0_25] : memref<1x4x128x128xf32, #tpu.memory_space<vmem>>, vector<1x1x128x128xf32>
    %48 = vector.shape_cast %47 : vector<1x1x128x128xf32> to vector<128x128xf32>
    %49 = vector.shape_cast %46 : vector<128x128xf32> to vector<1x1x128x128xf32>
    tpu.vector_store %arg9[%c0_22, %c0_23, %c0_24, %c0_25], %49 {strides = array<i32>} : memref<1x4x128x128xf32, #tpu.memory_space<vmem>>, vector<1x1x128x128xf32>,
    %c0_26 = arith.constant 0 : index
    %c1 = arith.constant 1 : index
    %c0_27 = arith.constant 0 : index
    %50 = vector.load %arg5[%c0_26, %c1, %c0_27] : memref<1x4x128xf32, #tpu.memory_space<vmem>>, vector<1x1x128xf32>
    %51 = vector.shape_cast %50 : vector<1x1x128xf32> to vector<1x128xf32>
    %c0_28 = arith.constant 0 : index
    %c0_29 = arith.constant 0 : index
    %c1_30 = arith.constant 1 : index
    %52 = vector.load %arg6[%c0_28, %c0_29, %c1_30] : memref<1x128x4xf32, #tpu.memory_space<vmem>>, vector<1x128x1xf32>
    %53 = vector.shape_cast %52 : vector<1x128x1xf32> to vector<128x1xf32>
    %54 = vector.broadcast %51 : vector<1x128xf32> to vector<128x128xf32>
    %55 = vector.broadcast %53 : vector<128x1xf32> to vector<128x128xf32>
    %56 = arith.addf %54, %55 : vector<128x128xf32>
    %57 = arith.mulf %56, %21 : vector<128x128xf32>
    %58 = arith.addf %37, %57 : vector<128x128xf32>
    %c0_31 = arith.constant 0 : index
    %c1_32 = arith.constant 1 : index
    %c0_33 = arith.constant 0 : index
    %c0_34 = arith.constant 0 : index
    %59 = vector.load %arg9[%c0_31, %c1_32, %c0_33, %c0_34] : memref<1x4x128x128xf32, #tpu.memory_space<vmem>>, vector<1x1x128x128xf32>
    %60 = vector.shape_cast %59 : vector<1x1x128x128xf32> to vector<128x128xf32>
    %61 = vector.shape_cast %58 : vector<128x128xf32> to vector<1x1x128x128xf32>
    tpu.vector_store %arg9[%c0_31, %c1_32, %c0_33, %c0_34], %61 {strides = array<i32>} : memref<1x4x128x128xf32, #tpu.memory_space<vmem>>, vector<1x1x128x128xf32>,
    %c0_35 = arith.constant 0 : index
    %c2 = arith.constant 2 : index
    %c0_36 = arith.constant 0 : index
    %62 = vector.load %arg5[%c0_35, %c2, %c0_36] : memref<1x4x128xf32, #tpu.memory_space<vmem>>, vector<1x1x128xf32>
    %63 = vector.shape_cast %62 : vector<1x1x128xf32> to vector<1x128xf32>
    %c0_37 = arith.constant 0 : index
    %c0_38 = arith.constant 0 : index
    %c2_39 = arith.constant 2 : index
    %64 = vector.load %arg6[%c0_37, %c0_38, %c2_39] : memref<1x128x4xf32, #tpu.memory_space<vmem>>, vector<1x128x1xf32>
    %65 = vector.shape_cast %64 : vector<1x128x1xf32> to vector<128x1xf32>
    %66 = vector.broadcast %63 : vector<1x128xf32> to vector<128x128xf32>
    %67 = vector.broadcast %65 : vector<128x1xf32> to vector<128x128xf32>
    %68 = arith.addf %66, %67 : vector<128x128xf32>
    %69 = arith.mulf %68, %21 : vector<128x128xf32>
    %70 = arith.addf %37, %69 : vector<128x128xf32>
    %c0_40 = arith.constant 0 : index
    %c2_41 = arith.constant 2 : index
    %c0_42 = arith.constant 0 : index
    %c0_43 = arith.constant 0 : index
    %71 = vector.load %arg9[%c0_40, %c2_41, %c0_42, %c0_43] : memref<1x4x128x128xf32, #tpu.memory_space<vmem>>, vector<1x1x128x128xf32>
    %72 = vector.shape_cast %71 : vector<1x1x128x128xf32> to vector<128x128xf32>
    %73 = vector.shape_cast %70 : vector<128x128xf32> to vector<1x1x128x128xf32>
    tpu.vector_store %arg9[%c0_40, %c2_41, %c0_42, %c0_43], %73 {strides = array<i32>} : memref<1x4x128x128xf32, #tpu.memory_space<vmem>>, vector<1x1x128x128xf32>,
    %c0_44 = arith.constant 0 : index
    %c3 = arith.constant 3 : index
    %c0_45 = arith.constant 0 : index
    %74 = vector.load %arg5[%c0_44, %c3, %c0_45] : memref<1x4x128xf32, #tpu.memory_space<vmem>>, vector<1x1x128xf32>
    %75 = vector.shape_cast %74 : vector<1x1x128xf32> to vector<1x128xf32>
    %c0_46 = arith.constant 0 : index
    %c0_47 = arith.constant 0 : index
    %c3_48 = arith.constant 3 : index
    %76 = vector.load %arg6[%c0_46, %c0_47, %c3_48] : memref<1x128x4xf32, #tpu.memory_space<vmem>>, vector<1x128x1xf32>
    %77 = vector.shape_cast %76 : vector<1x128x1xf32> to vector<128x1xf32>
    %78 = vector.broadcast %75 : vector<1x128xf32> to vector<128x128xf32>
    %79 = vector.broadcast %77 : vector<128x1xf32> to vector<128x128xf32>
    %80 = arith.addf %78, %79 : vector<128x128xf32>
    %81 = arith.mulf %80, %21 : vector<128x128xf32>
    %82 = arith.addf %37, %81 : vector<128x128xf32>
    %c0_49 = arith.constant 0 : index
    %c3_50 = arith.constant 3 : index
    %c0_51 = arith.constant 0 : index
    %c0_52 = arith.constant 0 : index
    %83 = vector.load %arg9[%c0_49, %c3_50, %c0_51, %c0_52] : memref<1x4x128x128xf32, #tpu.memory_space<vmem>>, vector<1x1x128x128xf32>
    %84 = vector.shape_cast %83 : vector<1x1x128x128xf32> to vector<128x128xf32>
    %85 = vector.shape_cast %82 : vector<128x128xf32> to vector<1x1x128x128xf32>
    tpu.vector_store %arg9[%c0_49, %c3_50, %c0_51, %c0_52], %85 {strides = array<i32>} : memref<1x4x128x128xf32, #tpu.memory_space<vmem>>, vector<1x1x128x128xf32>,
    return
  }
  func.func @transform_0(%arg0: i32, %arg1: i32, %arg2: i32) -> (i32, i32, i32) {
    %c0_i32 = arith.constant 0 : i32
    %c0_i32_0 = arith.constant 0 : i32
    return %arg0, %arg2, %c0_i32 : i32, i32, i32
  }
  func.func @transform_1(%arg0: i32, %arg1: i32, %arg2: i32) -> (i32, i32, i32) {
    %c0_i32 = arith.constant 0 : i32
    %c0_i32_0 = arith.constant 0 : i32
    %c0_i32_1 = arith.constant 0 : i32
    return %arg0, %c0_i32, %c0_i32_0 : i32, i32, i32
  }
  func.func @transform_2(%arg0: i32, %arg1: i32, %arg2: i32) -> (i32, i32, i32) {
    %c0_i32 = arith.constant 0 : i32
    %c0_i32_0 = arith.constant 0 : i32
    %c0_i32_1 = arith.constant 0 : i32
    return %arg0, %c0_i32, %c0_i32_0 : i32, i32, i32
  }
  func.func @transform_3(%arg0: i32, %arg1: i32, %arg2: i32) -> (i32, i32, i32) {
    %c0_i32 = arith.constant 0 : i32
    %c0_i32_0 = arith.constant 0 : i32
    return %arg0, %arg2, %c0_i32 : i32, i32, i32
  }
  func.func @transform_4(%arg0: i32, %arg1: i32, %arg2: i32) -> (i32, i32, i32) {
    %c0_i32 = arith.constant 0 : i32
    %c0_i32_0 = arith.constant 0 : i32
    return %arg0, %arg2, %c0_i32 : i32, i32, i32
  }
  func.func @transform_5(%arg0: i32, %arg1: i32, %arg2: i32) -> (i32, i32, i32) {
    %c0_i32 = arith.constant 0 : i32
    %c0_i32_0 = arith.constant 0 : i32
    %c0_i32_1 = arith.constant 0 : i32
    return %arg0, %c0_i32, %c0_i32_0 : i32, i32, i32
  }
  func.func @transform_6(%arg0: i32, %arg1: i32, %arg2: i32) -> (i32, i32, i32, i32) {
    %c0_i32 = arith.constant 0 : i32
    %c0_i32_0 = arith.constant 0 : i32
    return %arg0, %arg1, %arg2, %c0_i32 : i32, i32, i32, i32
  }
}

</mosaic_0001>

<llo_original>
// kernel: tpu_custom_call.1
$region0: #{tpu_custom_call.1}
  #allocation0 [shape = 'u32[]', space=smem, size = 0x4, offset = 0x4, fixed_abs, tag = 'smem constant byte address 0x4 - core index']
  #allocation1 [shape = 'u32[144,128]{1,0:T(1,128)}', space=vmem, size = 0x12000, scoped, tag = 'internal scratch']
  %s0 = inlined_call_operand.vmem [shape: f32[2,128,16], index: 0, kind: input, shape index: {}]
  %s1 = inlined_call_operand.vmem [shape: f32[2,16,128], index: 1, kind: input, shape index: {}]
  %s2 = inlined_call_operand.vmem [shape: f32[2,4,128], index: 2, kind: input, shape index: {}]
  %s3 = inlined_call_operand.vmem [shape: f32[2,128,4], index: 3, kind: input, shape index: {}]
  %s4 = inlined_call_operand.vmem [shape: f32[2,128,1], index: 4, kind: input, shape index: {}]
  %s5 = inlined_call_operand.vmem [shape: f32[2,1,128], index: 5, kind: input, shape index: {}]
  %s6 = inlined_call_operand.hbm [shape: f32[2,4,128,128], index: 6, kind: output, shape index: {}]
  %s7 = sld [smem:[#allocation0]]
  $region57: #{tpu_custom_call.1} parent=0
    _
  %s9 = ssub.s32 1, %s7
  %s10 = scalar_select 0, %s9, %s7
  $region1: #{tpu_custom_call.1} parent=0
    #allocation2 [shape = 'u8[524288]{0}', space=vmem, size = 0x80000, scoped, tag = 'output window, operand 0']
    #allocation3 [shape = 's32[2]{0}', space=sflag, size = 0x8, scoped, tag = 'scoped memory for tpu_custom_call.1']
    %11 = vsyncpa [#allocation3], 0
    %s12 = scalar_lea.sflag [#allocation3], 1
    %13 = vsyncpa %s12, 0
    loop: start=0, step=1, limit=4
    $region2: #{tpu_custom_call.1} parent=1 // loop_pre_header
      _
    $region3: #{tpu_custom_call.1} parent=1 // loop_header
      %s15 = sphi 0, %s19
      %p16 = scmp.ge.s32.totalorder %s15, 4
      %s22 = sphi 0, %s41
      %s23 = sphi 0, %s37
      %s24 = sphi 0, %s33
      %s25 = sphi 0, %s22
      %s26 = sphi 0, %s23
      %s27 = sphi 0, %s24
      %s28 = sphi 0, %s25
      %s29 = sphi 0, %s26
      %s30 = sphi 0, %s27
      %s46 = sphi 0, %s48
      %s49 = sphi 0, %s46
      %s50 = sphi 0, %s49
      %s66 = sphi 0, %s50
      %s72 = sphi 0, %s74
      %s75 = sphi 0, %s72
      %s76 = sphi 0, %s75
      %s92 = sphi 0, %s76
      %s98 = sphi 0, %s100
      %s101 = sphi 0, %s98
      %s102 = sphi 0, %s101
      %s118 = sphi 0, %s102
      %s126 = sphi 0, %s128
      %s129 = sphi 0, %s126
      %s130 = sphi 0, %s129
      %s146 = sphi 0, %s130
      %s154 = sphi 0, %s156
      %s157 = sphi 0, %s154
      %s158 = sphi 0, %s157
      %s174 = sphi 0, %s158
      %s180 = sphi 0, %s182
      %s183 = sphi 0, %s180
      %s184 = sphi 0, %s183
      %s200 = sphi 0, %s184
      %s210 = sphi 0, %s212
      %s213 = sphi 0, %s210
      %s214 = sphi 0, %s213
      %s230 = sphi 0, %s214
    $region4: #{tpu_custom_call.1} parent=1 // loop_header_branch
      %18 = sbr.rel (%p16) target = $region8
    $region5: #{tpu_custom_call.1} parent=1 // loop_body
      %s20 = ssub.s32 %s15, 1
      %s21 = ssub.s32 %s15, 2
      %s31 = sadd.s32 1, %s24
      %p32 = scmp.ge.s32.totalorder %s31, 1
      %s33 = scalar_select %p32, 0, %s31
      %s34 = sadd.s32 1, %s23
      %s35 = scalar_select %p32, %s34, %s23
      %p36 = scmp.ge.s32.totalorder %s35, 1
      %s37 = scalar_select %p36, 0, %s35
      %s38 = sadd.s32 1, %s22
      %s39 = scalar_select %p36, %s38, %s22
      %p40 = scmp.ge.s32.totalorder %s39, 2
      %s41 = scalar_select %p40, 0, %s39
      %s42 = ssub.s32 %s22, %s41
      %s43 = ssub.s32 %s24, %s33
      %s44 = sor.u32 %s42, %s43
      %p45 = scmp.eq.s32.totalorder %s44, 0
      %s47 = sadd.s32 %s46, 1
      %s48 = scalar_select %p45, %s46, %s47
      %p51 = pneg %p45
      %p52 = scmp.eq.s32.totalorder %s15, 1
      %p53 = por %p51, %p52
      %p54 = scmp.ne.s32.totalorder %s46, %s49
      %p55 = scmp.eq.s32.totalorder %s15, 0
      %p56 = por %p54, %p55
      %p57 = scmp.ne.s32.totalorder %s46, %s49
      %p58 = scmp.eq.s32.totalorder %s20, 1
      %p59 = por %p57, %p58
      %p60 = scmp.ne.s32.totalorder %s49, %s50
      %p61 = scmp.eq.s32.totalorder %s20, 0
      %p62 = por %p60, %p61
      %p63 = scmp.ne.s32.totalorder %s49, %s50
      %p64 = scmp.eq.s32.totalorder %s21, 1
      %p65 = por %p63, %p64
      %p67 = scmp.ne.s32.totalorder %s50, %s66
      %p68 = scmp.eq.s32.totalorder %s21, 0
      %p69 = por %p67, %p68
      %s70 = ssub.s32 %s22, %s41
      %p71 = scmp.eq.s32.totalorder %s70, 0
      %s73 = sadd.s32 %s72, 1
      %s74 = scalar_select %p71, %s72, %s73
      %p77 = pneg %p71
      %p78 = scmp.eq.s32.totalorder %s15, 1
      %p79 = por %p77, %p78
      %p80 = scmp.ne.s32.totalorder %s72, %s75
      %p81 = scmp.eq.s32.totalorder %s15, 0
      %p82 = por %p80, %p81
      %p83 = scmp.ne.s32.totalorder %s72, %s75
      %p84 = scmp.eq.s32.totalorder %s20, 1
      %p85 = por %p83, %p84
      %p86 = scmp.ne.s32.totalorder %s75, %s76
      %p87 = scmp.eq.s32.totalorder %s20, 0
      %p88 = por %p86, %p87
      %p89 = scmp.ne.s32.totalorder %s75, %s76
      %p90 = scmp.eq.s32.totalorder %s21, 1
      %p91 = por %p89, %p90
      %p93 = scmp.ne.s32.totalorder %s76, %s92
      %p94 = scmp.eq.s32.totalorder %s21, 0
      %p95 = por %p93, %p94
      %s96 = ssub.s32 %s22, %s41
      %p97 = scmp.eq.s32.totalorder %s96, 0
      %s99 = sadd.s32 %s98, 1
      %s100 = scalar_select %p97, %s98, %s99
      %p103 = pneg %p97
      %p104 = scmp.eq.s32.totalorder %s15, 1
      %p105 = por %p103, %p104
      %p106 = scmp.ne.s32.totalorder %s98, %s101
      %p107 = scmp.eq.s32.totalorder %s15, 0
      %p108 = por %p106, %p107
      %p109 = scmp.ne.s32.totalorder %s98, %s101
      %p110 = scmp.eq.s32.totalorder %s20, 1
      %p111 = por %p109, %p110
      %p112 = scmp.ne.s32.totalorder %s101, %s102
      %p113 = scmp.eq.s32.totalorder %s20, 0
      %p114 = por %p112, %p113
      %p115 = scmp.ne.s32.totalorder %s101, %s102
      %p116 = scmp.eq.s32.totalorder %s21, 1
      %p117 = por %p115, %p116
      %p119 = scmp.ne.s32.totalorder %s102, %s118
      %p120 = scmp.eq.s32.totalorder %s21, 0
      %p121 = por %p119, %p120
      %s122 = ssub.s32 %s22, %s41
      %s123 = ssub.s32 %s24, %s33
      %s124 = sor.u32 %s122, %s123
      %p125 = scmp.eq.s32.totalorder %s124, 0
      %s127 = sadd.s32 %s126, 1
      %s128 = scalar_select %p125, %s126, %s127
      %p131 = pneg %p125
      %p132 = scmp.eq.s32.totalorder %s15, 1
      %p133 = por %p131, %p132
      %p134 = scmp.ne.s32.totalorder %s126, %s129
      %p135 = scmp.eq.s32.totalorder %s15, 0
      %p136 = por %p134, %p135
      %p137 = scmp.ne.s32.totalorder %s126, %s129
      %p138 = scmp.eq.s32.totalorder %s20, 1
      %p139 = por %p137, %p138
      %p140 = scmp.ne.s32.totalorder %s129, %s130
      %p141 = scmp.eq.s32.totalorder %s20, 0
      %p142 = por %p140, %p141
      %p143 = scmp.ne.s32.totalorder %s129, %s130
      %p144 = scmp.eq.s32.totalorder %s21, 1
      %p145 = por %p143, %p144
      %p147 = scmp.ne.s32.totalorder %s130, %s146
      %p148 = scmp.eq.s32.totalorder %s21, 0
      %p149 = por %p147, %p148
      %s150 = ssub.s32 %s22, %s41
      %s151 = ssub.s32 %s24, %s33
      %s152 = sor.u32 %s150, %s151
      %p153 = scmp.eq.s32.totalorder %s152, 0
      %s155 = sadd.s32 %s154, 1
      %s156 = scalar_select %p153, %s154, %s155
      %p159 = pneg %p153
      %p160 = scmp.eq.s32.totalorder %s15, 1
      %p161 = por %p159, %p160
      %p162 = scmp.ne.s32.totalorder %s154, %s157
      %p163 = scmp.eq.s32.totalorder %s15, 0
      %p164 = por %p162, %p163
      %p165 = scmp.ne.s32.totalorder %s154, %s157
      %p166 = scmp.eq.s32.totalorder %s20, 1
      %p167 = por %p165, %p166
      %p168 = scmp.ne.s32.totalorder %s157, %s158
      %p169 = scmp.eq.s32.totalorder %s20, 0
      %p170 = por %p168, %p169
      %p171 = scmp.ne.s32.totalorder %s157, %s158
      %p172 = scmp.eq.s32.totalorder %s21, 1
      %p173 = por %p171, %p172
      %p175 = scmp.ne.s32.totalorder %s158, %s174
      %p176 = scmp.eq.s32.totalorder %s21, 0
      %p177 = por %p175, %p176
      %s178 = ssub.s32 %s22, %s41
      %p179 = scmp.eq.s32.totalorder %s178, 0
      %s181 = sadd.s32 %s180, 1
      %s182 = scalar_select %p179, %s180, %s181
      %p185 = pneg %p179
      %p186 = scmp.eq.s32.totalorder %s15, 1
      %p187 = por %p185, %p186
      %p188 = scmp.ne.s32.totalorder %s180, %s183
      %p189 = scmp.eq.s32.totalorder %s15, 0
      %p190 = por %p188, %p189
      %p191 = scmp.ne.s32.totalorder %s180, %s183
      %p192 = scmp.eq.s32.totalorder %s20, 1
      %p193 = por %p191, %p192
      %p194 = scmp.ne.s32.totalorder %s183, %s184
      %p195 = scmp.eq.s32.totalorder %s20, 0
      %p196 = por %p194, %p195
      %p197 = scmp.ne.s32.totalorder %s183, %s184
      %p198 = scmp.eq.s32.totalorder %s21, 1
      %p199 = por %p197, %p198
      %p201 = scmp.ne.s32.totalorder %s184, %s200
      %p202 = scmp.eq.s32.totalorder %s21, 0
      %p203 = por %p201, %p202
      %s204 = ssub.s32 %s22, %s41
      %s205 = ssub.s32 %s23, %s37
      %s206 = sor.u32 %s204, %s205
      %s207 = ssub.s32 %s24, %s33
      %s208 = sor.u32 %s206, %s207
      %p209 = scmp.eq.s32.totalorder %s208, 0
      %s211 = sadd.s32 %s210, 1
      %s212 = scalar_select %p209, %s210, %s211
      %p215 = pneg %p209
      %p216 = scmp.eq.s32.totalorder %s15, 1
      %p217 = por %p215, %p216
      %p218 = scmp.ne.s32.totalorder %s210, %s213
      %p219 = scmp.eq.s32.totalorder %s15, 0
      %p220 = por %p218, %p219
      %p221 = scmp.ne.s32.totalorder %s210, %s213
      %p222 = scmp.eq.s32.totalorder %s20, 1
      %p223 = por %p221, %p222
      %p224 = scmp.ne.s32.totalorder %s213, %s214
      %p225 = scmp.eq.s32.totalorder %s20, 0
      %p226 = por %p224, %p225
      %p227 = scmp.ne.s32.totalorder %s213, %s214
      %p228 = scmp.eq.s32.totalorder %s21, 1
      %p229 = por %p227, %p228
      %p231 = scmp.ne.s32.totalorder %s214, %s230
      %p232 = scmp.eq.s32.totalorder %s21, 0
      %p233 = por %p231, %p232
      %p234 = scmp.le.s32.totalorder 1, %s15
      %p235 = scmp.lt.s32.totalorder %s15, 3
      %p236 = pnand %p234, %p235
      %p237 = pneg %p236
      // Predicated region
      $region9: #{tpu_custom_call.1} parent=5 // pred_check
        _
      $region10: #{tpu_custom_call.1} parent=5 // pred_check_branch
        %239 = sbr.rel (%p236) target = $region12
      $region11: #{tpu_custom_call.1} parent=5 // pred_region
        %s240 = ssub.s32 %s15, 1
      $region12: #{tpu_custom_call.1} parent=5 // pred_fallthru
        _
      %p241 = scmp.lt.s32.totalorder %s15, 2
      // Predicated region
      $region13: #{tpu_custom_call.1} parent=5 // pred_check
        %p242 = pneg %p241
      $region14: #{tpu_custom_call.1} parent=5 // pred_check_branch
        %244 = sbr.rel (%p242) target = $region16
      $region15: #{tpu_custom_call.1} parent=5 // pred_region
        // Predicated region
        $region17: #{tpu_custom_call.1} parent=15 // pred_check
          %p245 = pneg %p56
        $region18: #{tpu_custom_call.1} parent=15 // pred_check_branch
          %247 = sbr.rel (%p245) target = $region20
        $region19: #{tpu_custom_call.1} parent=15 // pred_region
          %s248 = smul.u32 16, %s24
          %p249 = scmp.lt.s32.totalorder %s22, 1
          %s250 = scalar_select %p249, %s22, 1
          %p251 = scmp.lt.s32.totalorder %s248, 15
          %s252 = scalar_select %p251, %s248, 15
          %s253 = smul.addr %s250, 16
          %s254 = sadd.s32 %s252, %s253
          %s255 = smul.addr %s254, 8
          %s256 = scalar_lea.vmem %s0, %s255
          %s257 = smul.u32 16, %s24
        $region20: #{tpu_custom_call.1} parent=15 // pred_fallthru
          _
        // Predicated region
        $region21: #{tpu_custom_call.1} parent=15 // pred_check
          %p258 = pneg %p82
        $region22: #{tpu_custom_call.1} parent=15 // pred_check_branch
          %260 = sbr.rel (%p258) target = $region24
        $region23: #{tpu_custom_call.1} parent=15 // pred_region
          %p261 = scmp.lt.s32.totalorder %s22, 1
          %s262 = scalar_select %p261, %s22, 1
          %s263 = smul.addr %s262, 2
          %s264 = smul.addr %s263, 8
          %s265 = scalar_lea.vmem %s1, %s264
        $region24: #{tpu_custom_call.1} parent=15 // pred_fallthru
          _
        // Predicated region
        $region25: #{tpu_custom_call.1} parent=15 // pred_check
          %p266 = pneg %p108
        $region26: #{tpu_custom_call.1} parent=15 // pred_check_branch
          %268 = sbr.rel (%p266) target = $region28
        $region27: #{tpu_custom_call.1} parent=15 // pred_region
          %p269 = scmp.lt.s32.totalorder %s22, 1
          %s270 = scalar_select %p269, %s22, 1
          %s271 = smul.addr %s270, 4
          %s272 = scalar_lea.vmem %s2, %s271
        $region28: #{tpu_custom_call.1} parent=15 // pred_fallthru
          _
        // Predicated region
        $region29: #{tpu_custom_call.1} parent=15 // pred_check
          %p273 = pneg %p136
        $region30: #{tpu_custom_call.1} parent=15 // pred_check_branch
          %275 = sbr.rel (%p273) target = $region32
        $region31: #{tpu_custom_call.1} parent=15 // pred_region
          %s276 = smul.u32 16, %s24
          %p277 = scmp.lt.s32.totalorder %s22, 1
          %s278 = scalar_select %p277, %s22, 1
          %p279 = scmp.lt.s32.totalorder %s276, 15
          %s280 = scalar_select %p279, %s276, 15
          %s281 = smul.addr %s278, 16
          %s282 = sadd.s32 %s280, %s281
          %s283 = smul.addr %s282, 8
          %s284 = scalar_lea.vmem %s3, %s283
          %s285 = smul.u32 16, %s24
        $region32: #{tpu_custom_call.1} parent=15 // pred_fallthru
          _
        // Predicated region
        $region33: #{tpu_custom_call.1} parent=15 // pred_check
          %p286 = pneg %p164
        $region34: #{tpu_custom_call.1} parent=15 // pred_check_branch
          %288 = sbr.rel (%p286) target = $region36
        $region35: #{tpu_custom_call.1} parent=15 // pred_region
          %s289 = smul.u32 16, %s24
          %p290 = scmp.lt.s32.totalorder %s22, 1
          %s291 = scalar_select %p290, %s22, 1
          %p292 = scmp.lt.s32.totalorder %s289, 15
          %s293 = scalar_select %p292, %s289, 15
          %s294 = smul.addr %s291, 16
          %s295 = sadd.s32 %s293, %s294
          %s296 = smul.addr %s295, 8
          %s297 = scalar_lea.vmem %s4, %s296
          %s298 = smul.u32 16, %s24
        $region36: #{tpu_custom_call.1} parent=15 // pred_fallthru
          _
        // Predicated region
        $region37: #{tpu_custom_call.1} parent=15 // pred_check
          %p299 = pneg %p190
        $region38: #{tpu_custom_call.1} parent=15 // pred_check_branch
          %301 = sbr.rel (%p299) target = $region40
        $region39: #{tpu_custom_call.1} parent=15 // pred_region
          %p302 = scmp.lt.s32.totalorder %s22, 1
          %s303 = scalar_select %p302, %s22, 1
          %s304 = scalar_lea.vmem %s5, %s303
        $region40: #{tpu_custom_call.1} parent=15 // pred_fallthru
          _
      $region16: #{tpu_custom_call.1} parent=5 // pred_fallthru
        _
      %p305 = scmp.le.s32.totalorder 1, %s15
      %p306 = scmp.lt.s32.totalorder %s15, 3
      %p307 = pnand %p305, %p306
      %p308 = pneg %p307
      // Predicated region
      $region41: #{tpu_custom_call.1} parent=5 // pred_check
        _
      $region42: #{tpu_custom_call.1} parent=5 // pred_check_branch
        %310 = sbr.rel (%p307) target = $region44
      $region43: #{tpu_custom_call.1} parent=5 // pred_region
        %s311 = ssub.s32 %s15, 1
        %s312 = smul.u32 16, %s27
        %p313 = scmp.lt.s32.totalorder %s25, 1
        %s314 = scalar_select %p313, %s25, 1
        %p315 = scmp.lt.s32.totalorder %s312, 15
        %s316 = scalar_select %p315, %s312, 15
        %s317 = smul.addr %s314, 16
        %s318 = sadd.s32 %s316, %s317
        %s319 = smul.addr %s318, 8
        %s320 = scalar_lea.vmem %s0, %s319
        %p321 = pneg %p62
        %p322 = pneg %p59
        %p323 = scmp.lt.s32.totalorder %s25, 1
        %s324 = scalar_select %p323, %s25, 1
        %s325 = smul.addr %s324, 2
        %s326 = smul.addr %s325, 8
        %s327 = scalar_lea.vmem %s1, %s326
        %p328 = pneg %p88
        %p329 = pneg %p85
        %p330 = scmp.lt.s32.totalorder %s25, 1
        %s331 = scalar_select %p330, %s25, 1
        %s332 = smul.addr %s331, 4
        %s333 = scalar_lea.vmem %s2, %s332
        %p334 = pneg %p114
        %p335 = pneg %p111
        %s336 = smul.u32 16, %s27
        %p337 = scmp.lt.s32.totalorder %s25, 1
        %s338 = scalar_select %p337, %s25, 1
        %p339 = scmp.lt.s32.totalorder %s336, 15
        %s340 = scalar_select %p339, %s336, 15
        %s341 = smul.addr %s338, 16
        %s342 = sadd.s32 %s340, %s341
        %s343 = smul.addr %s342, 8
        %s344 = scalar_lea.vmem %s3, %s343
        %p345 = pneg %p142
        %p346 = pneg %p139
        %s347 = smul.u32 16, %s27
        %p348 = scmp.lt.s32.totalorder %s25, 1
        %s349 = scalar_select %p348, %s25, 1
        %p350 = scmp.lt.s32.totalorder %s347, 15
        %s351 = scalar_select %p350, %s347, 15
        %s352 = smul.addr %s349, 16
        %s353 = sadd.s32 %s351, %s352
        %s354 = smul.addr %s353, 8
        %s355 = scalar_lea.vmem %s4, %s354
        %p356 = pneg %p170
        %p357 = pneg %p167
        %p358 = scmp.lt.s32.totalorder %s25, 1
        %s359 = scalar_select %p358, %s25, 1
        %s360 = scalar_lea.vmem %s5, %s359
        %p361 = pneg %p196
        %p362 = pneg %p193
        %p363 = pneg %p226
        %p364 = pneg %p223
        %s365 = sand.u32 %s213, 1
        %s366 = scalar_lea.sflag [#allocation3], %s365
        %s367 = sand.u32 %s213, 1
        %s368 = smul.addr %s367, 512
        %s369 = scalar_lea.vmem [#allocation2], %s368
        %s370 = smul.u32 16, %s27
        %p371 = scmp.lt.s32.totalorder %s25, 1
        %s372 = scalar_select %p371, %s25, 1
        %p373 = scmp.lt.s32.totalorder %s370, 15
        %s374 = scalar_select %p373, %s370, 15
        %s375 = smul.addr %s372, 16
        %s376 = sadd.s32 %s374, %s375
        %s377 = smul.addr %s376, 8
        %s378 = scalar_lea.vmem %s0, %s377
        %s379 = smul.u32 16, %s27
        %p380 = scmp.lt.s32.totalorder %s25, 1
        %s381 = scalar_select %p380, %s25, 1
        %s382 = smul.addr %s381, 2
        %s383 = smul.addr %s382, 8
        %s384 = scalar_lea.vmem %s1, %s383
        %p385 = scmp.lt.s32.totalorder %s25, 1
        %s386 = scalar_select %p385, %s25, 1
        %s387 = smul.addr %s386, 4
        %s388 = scalar_lea.vmem %s2, %s387
        %s389 = smul.u32 16, %s27
        %p390 = scmp.lt.s32.totalorder %s25, 1
        %s391 = scalar_select %p390, %s25, 1
        %p392 = scmp.lt.s32.totalorder %s389, 15
        %s393 = scalar_select %p392, %s389, 15
        %s394 = smul.addr %s391, 16
        %s395 = sadd.s32 %s393, %s394
        %s396 = smul.addr %s395, 8
        %s397 = scalar_lea.vmem %s3, %s396
        %s398 = smul.u32 16, %s27
        %s399 = smul.u32 16, %s27
        %p400 = scmp.lt.s32.totalorder %s25, 1
        %s401 = scalar_select %p400, %s25, 1
        %p402 = scmp.lt.s32.totalorder %s399, 15
        %s403 = scalar_select %p402, %s399, 15
        %s404 = smul.addr %s401, 16
        %s405 = sadd.s32 %s403, %s404
        %s406 = smul.addr %s405, 8
        %s407 = scalar_lea.vmem %s4, %s406
        %s408 = smul.u32 16, %s27
        %p409 = scmp.lt.s32.totalorder %s25, 1
        %s410 = scalar_select %p409, %s25, 1
        %s411 = scalar_lea.vmem %s5, %s410
        %s412 = smul.u32 4, %s26
        %s413 = smul.u32 16, %s27
        %v414 = vld [vmem:[%s378] sm:$0xff]
        %v415 = vld [vmem:[%s378 + $0x8] sm:$0xff]
        %v416 = vld [vmem:[%s378 + $0x10] sm:$0xff]
        %v417 = vld [vmem:[%s378 + $0x18] sm:$0xff]
        %v418 = vld [vmem:[%s378 + $0x20] sm:$0xff]
        %v419 = vld [vmem:[%s378 + $0x28] sm:$0xff]
        %v420 = vld [vmem:[%s378 + $0x30] sm:$0xff]
        %v421 = vld [vmem:[%s378 + $0x38] sm:$0xff]
        %v422 = vld [vmem:[%s378 + $0x40] sm:$0xff]
        %v423 = vld [vmem:[%s378 + $0x48] sm:$0xff]
        %v424 = vld [vmem:[%s378 + $0x50] sm:$0xff]
        %v425 = vld [vmem:[%s378 + $0x58] sm:$0xff]
        %v426 = vld [vmem:[%s378 + $0x60] sm:$0xff]
        %v427 = vld [vmem:[%s378 + $0x68] sm:$0xff]
        %v428 = vld [vmem:[%s378 + $0x70] sm:$0xff]
        %v429 = vld [vmem:[%s378 + $0x78] sm:$0xff]
        %v430 = vld [vmem:[%s384] sm:$0xff]
        %v431 = vld [vmem:[%s384 + $0x8] sm:$0xff]
        %vm432 = vcmask 130048
        %v434 = vsel %vm432, %v414, 0
        %v437 = vsel %vm432, %v415, 0
        %v440 = vsel %vm432, %v416, 0
        %v443 = vsel %vm432, %v417, 0
        %v446 = vsel %vm432, %v418, 0
        %v449 = vsel %vm432, %v419, 0
        %v452 = vsel %vm432, %v420, 0
        %v455 = vsel %vm432, %v421, 0
        %v458 = vsel %vm432, %v422, 0
        %v461 = vsel %vm432, %v423, 0
        %v464 = vsel %vm432, %v424, 0
        %v467 = vsel %vm432, %v425, 0
        %v470 = vsel %vm432, %v426, 0
        %v473 = vsel %vm432, %v427, 0
        %v476 = vsel %vm432, %v428, 0
        %v479 = vsel %vm432, %v429, 0
        %481 = vmatprep.subr.mxu0 0.0
        %482 = vmatpush1.msra.mxu0 %v430
        %483 = vmatprep.subr.mxu0 0.0
        %484 = vmatpush1.msra.mxu0 %v431
        %485 = vmatprep.subr.mxu0 0.0
        %486 = vmatpush1.msra.mxu0 0.0
        %487 = vmatprep.subr.mxu0 0.0
        %488 = vmatpush1.msra.mxu0 0.0
        %489 = vmatprep.subr.mxu0 0.0
        %490 = vmatpush1.msra.mxu0 0.0
        %491 = vmatprep.subr.mxu0 0.0
        %492 = vmatpush1.msra.mxu0 0.0
        %493 = vmatprep.subr.mxu0 0.0
        %494 = vmatpush1.msra.mxu0 0.0
        %495 = vmatprep.subr.mxu0 0.0
        %496 = vmatpush1.msra.mxu0 0.0
        %497 = vmatprep.subr.mxu0 0.0
        %498 = vmatpush1.msra.mxu0 0.0
        %499 = vmatprep.subr.mxu0 0.0
        %500 = vmatpush1.msra.mxu0 0.0
        %501 = vmatprep.subr.mxu0 0.0
        %502 = vmatpush1.msra.mxu0 0.0
        %503 = vmatprep.subr.mxu0 0.0
        %504 = vmatpush1.msra.mxu0 0.0
        %505 = vmatprep.subr.mxu0 0.0
        %506 = vmatpush1.msra.mxu0 0.0
        %507 = vmatprep.subr.mxu0 0.0
        %508 = vmatpush1.msra.mxu0 0.0
        %509 = vmatprep.subr.mxu0 0.0
        %510 = vmatpush1.msra.mxu0 0.0
        %511 = vmatprep.subr.mxu0 0.0
        %512 = vmatpush1.msra.mxu0 0.0
        %513 = vmatprep.subr.mxu0 0.0
        %514 = vmatpush1.msra.mxu0 0.0
        %515 = vmatprep.subr.mxu0 0.0
        %516 = vmatpush1.msra.mxu0 0.0
        %517 = vmatprep.subr.mxu0 0.0
        %518 = vmatpush1.msra.mxu0 0.0
        %519 = vmatprep.subr.mxu0 0.0
        %520 = vmatpush1.msra.mxu0 0.0
        %521 = vmatprep.subr.mxu0 0.0
        %522 = vmatpush1.msra.mxu0 0.0
        %523 = vmatprep.subr.mxu0 0.0
        %524 = vmatpush1.msra.mxu0 0.0
        %525 = vmatprep.subr.mxu0 0.0
        %526 = vmatpush1.msra.mxu0 0.0
        %527 = vmatprep.subr.mxu0 0.0
        %528 = vmatpush1.msra.mxu0 0.0
        %529 = vmatprep.subr.mxu0 0.0
        %530 = vmatpush1.msra.mxu0 0.0
        %531 = vmatprep.subr.mxu0 0.0
        %532 = vmatpush1.msra.mxu0 0.0
        %533 = vmatprep.subr.mxu0 0.0
        %534 = vmatpush1.msra.mxu0 0.0
        %535 = vmatprep.subr.mxu0 0.0
        %536 = vmatpush1.msra.mxu0 0.0
        %537 = vmatprep.subr.mxu0 0.0
        %538 = vmatpush1.msra.mxu0 0.0
        %539 = vmatprep.subr.mxu0 0.0
        %540 = vmatpush1.msra.mxu0 0.0
        %541 = vmatprep.subr.mxu0 0.0
        %542 = vmatpush1.msra.mxu0 0.0
        %543 = vmatprep.subr.mxu0 0.0
        %544 = vmatpush1.msra.mxu0 0.0
        %545 = vmatprep.mubr.f32.mxu0 0.0
        %546 = vmatmul.mubr.f32.gmra.mrb[0].mxu0 %v434
        %v547 = vpop.f32.mrb[0].mxu0
        %v548 = vadd.f32 0.0, %v547
        %v549 = vpop.f32.mrb[0].mxu0
        %550 = vmatprep.mubr.f32.mxu0 0.0
        %551 = vmatmul.mubr.f32.gmra.mrb[0].mxu0 %v437
        %v552 = vpop.f32.mrb[0].mxu0
        %v553 = vadd.f32 0.0, %v552
        %v554 = vpop.f32.mrb[0].mxu0
        %555 = vmatprep.mubr.f32.mxu0 0.0
        %556 = vmatmul.mubr.f32.gmra.mrb[0].mxu0 %v440
        %v557 = vpop.f32.mrb[0].mxu0
        %v558 = vadd.f32 0.0, %v557
        %v559 = vpop.f32.mrb[0].mxu0
        %560 = vmatprep.mubr.f32.mxu0 0.0
        %561 = vmatmul.mubr.f32.gmra.mrb[0].mxu0 %v443
        %v562 = vpop.f32.mrb[0].mxu0
        %v563 = vadd.f32 0.0, %v562
        %v564 = vpop.f32.mrb[0].mxu0
        %565 = vmatprep.mubr.f32.mxu0 0.0
        %566 = vmatmul.mubr.f32.gmra.mrb[0].mxu0 %v446
        %v567 = vpop.f32.mrb[0].mxu0
        %v568 = vadd.f32 0.0, %v567
        %v569 = vpop.f32.mrb[0].mxu0
        %570 = vmatprep.mubr.f32.mxu0 0.0
        %571 = vmatmul.mubr.f32.gmra.mrb[0].mxu0 %v449
        %v572 = vpop.f32.mrb[0].mxu0
        %v573 = vadd.f32 0.0, %v572
        %v574 = vpop.f32.mrb[0].mxu0
        %575 = vmatprep.mubr.f32.mxu0 0.0
        %576 = vmatmul.mubr.f32.gmra.mrb[0].mxu0 %v452
        %v577 = vpop.f32.mrb[0].mxu0
        %v578 = vadd.f32 0.0, %v577
        %v579 = vpop.f32.mrb[0].mxu0
        %580 = vmatprep.mubr.f32.mxu0 0.0
        %581 = vmatmul.mubr.f32.gmra.mrb[0].mxu0 %v455
        %v582 = vpop.f32.mrb[0].mxu0
        %v583 = vadd.f32 0.0, %v582
        %v584 = vpop.f32.mrb[0].mxu0
        %585 = vmatprep.mubr.f32.mxu0 0.0
        %586 = vmatmul.mubr.f32.gmra.mrb[0].mxu0 %v458
        %v587 = vpop.f32.mrb[0].mxu0
        %v588 = vadd.f32 0.0, %v587
        %v589 = vpop.f32.mrb[0].mxu0
        %590 = vmatprep.mubr.f32.mxu0 0.0
        %591 = vmatmul.mubr.f32.gmra.mrb[0].mxu0 %v461
        %v592 = vpop.f32.mrb[0].mxu0
        %v593 = vadd.f32 0.0, %v592
        %v594 = vpop.f32.mrb[0].mxu0
        %595 = vmatprep.mubr.f32.mxu0 0.0
        %596 = vmatmul.mubr.f32.gmra.mrb[0].mxu0 %v464
        %v597 = vpop.f32.mrb[0].mxu0
        %v598 = vadd.f32 0.0, %v597
        %v599 = vpop.f32.mrb[0].mxu0
        %600 = vmatprep.mubr.f32.mxu0 0.0
        %601 = vmatmul.mubr.f32.gmra.mrb[0].mxu0 %v467
        %v602 = vpop.f32.mrb[0].mxu0
        %v603 = vadd.f32 0.0, %v602
        %v604 = vpop.f32.mrb[0].mxu0
        %605 = vmatprep.mubr.f32.mxu0 0.0
        %606 = vmatmul.mubr.f32.gmra.mrb[0].mxu0 %v470
        %v607 = vpop.f32.mrb[0].mxu0
        %v608 = vadd.f32 0.0, %v607
        %v609 = vpop.f32.mrb[0].mxu0
        %610 = vmatprep.mubr.f32.mxu0 0.0
        %611 = vmatmul.mubr.f32.gmra.mrb[0].mxu0 %v473
        %v612 = vpop.f32.mrb[0].mxu0
        %v613 = vadd.f32 0.0, %v612
        %v614 = vpop.f32.mrb[0].mxu0
        %615 = vmatprep.mubr.f32.mxu0 0.0
        %616 = vmatmul.mubr.f32.gmra.mrb[0].mxu0 %v476
        %v617 = vpop.f32.mrb[0].mxu0
        %v618 = vadd.f32 0.0, %v617
        %v619 = vpop.f32.mrb[0].mxu0
        %620 = vmatprep.mubr.f32.mxu0 0.0
        %621 = vmatmul.mubr.f32.gmra.mrb[0].mxu0 %v479
        %v622 = vpop.f32.mrb[0].mxu0
        %v623 = vadd.f32 0.0, %v622
        %v624 = vpop.f32.mrb[0].mxu0
        %625 = vdwg.mxu0
        %v626 = vmul.f32 %v548, 0.25
        %v627 = vmul.f32 %v553, 0.25
        %v628 = vmul.f32 %v558, 0.25
        %v629 = vmul.f32 %v563, 0.25
        %v630 = vmul.f32 %v568, 0.25
        %v631 = vmul.f32 %v573, 0.25
        %v632 = vmul.f32 %v578, 0.25
        %v633 = vmul.f32 %v583, 0.25
        %v634 = vmul.f32 %v588, 0.25
        %v635 = vmul.f32 %v593, 0.25
        %v636 = vmul.f32 %v598, 0.25
        %v637 = vmul.f32 %v603, 0.25
        %v638 = vmul.f32 %v608, 0.25
        %v639 = vmul.f32 %v613, 0.25
        %v640 = vmul.f32 %v618, 0.25
        %v641 = vmul.f32 %v623, 0.25
        %v642 = vld [vmem:[%s407] sm:$0xff]
        %v643 = vld [vmem:[%s407 + $0x8] sm:$0xff]
        %v644 = vld [vmem:[%s407 + $0x10] sm:$0xff]
        %v645 = vld [vmem:[%s407 + $0x18] sm:$0xff]
        %v646 = vld [vmem:[%s407 + $0x20] sm:$0xff]
        %v647 = vld [vmem:[%s407 + $0x28] sm:$0xff]
        %v648 = vld [vmem:[%s407 + $0x30] sm:$0xff]
        %v649 = vld [vmem:[%s407 + $0x38] sm:$0xff]
        %v650 = vld [vmem:[%s407 + $0x40] sm:$0xff]
        %v651 = vld [vmem:[%s407 + $0x48] sm:$0xff]
        %v652 = vld [vmem:[%s407 + $0x50] sm:$0xff]
        %v653 = vld [vmem:[%s407 + $0x58] sm:$0xff]
        %v654 = vld [vmem:[%s407 + $0x60] sm:$0xff]
        %v655 = vld [vmem:[%s407 + $0x68] sm:$0xff]
        %v656 = vld [vmem:[%s407 + $0x70] sm:$0xff]
        %v657 = vld [vmem:[%s407 + $0x78] sm:$0xff]
        %v658 = vld [vmem:[%s411] sm:$0x1]
        %s659 = smul.u32 %s27, 128
        %v660 = vlaneseq
        %v661 = vshrl.u32 %v660, 7
        %v662 = vadd.s32 %v661, 8
        %v663 = vadd.s32 %v661, 16
        %v664 = vadd.s32 %v661, 24
        %v665 = vadd.s32 %v661, 32
        %v666 = vadd.s32 %v661, 40
        %v667 = vadd.s32 %v661, 48
        %v668 = vadd.s32 %v661, 56
        %v669 = vadd.s32 %v661, 64
        %v670 = vadd.s32 %v661, 72
        %v671 = vadd.s32 %v661, 80
        %v672 = vadd.s32 %v661, 88
        %v673 = vadd.s32 %v661, 96
        %v674 = vadd.s32 %v661, 104
        %v675 = vadd.s32 %v661, 112
        %v676 = vadd.s32 %v661, 120
        %v677 = vstv %s659
        %v678 = vadd.s32 %v661, %v677
        %v679 = vadd.s32 %v662, %v677
        %v680 = vadd.s32 %v663, %v677
        %v681 = vadd.s32 %v664, %v677
        %v682 = vadd.s32 %v665, %v677
        %v683 = vadd.s32 %v666, %v677
        %v684 = vadd.s32 %v667, %v677
        %v685 = vadd.s32 %v668, %v677
        %v686 = vadd.s32 %v669, %v677
        %v687 = vadd.s32 %v670, %v677
        %v688 = vadd.s32 %v671, %v677
        %v689 = vadd.s32 %v672, %v677
        %v690 = vadd.s32 %v673, %v677
        %v691 = vadd.s32 %v674, %v677
        %v692 = vadd.s32 %v675, %v677
        %v693 = vadd.s32 %v676, %v677
        %v694 = vlaneseq
        %v695 = vand.u32 %v694, 127
        %vm696 = vcmp.gt.s32.totalorder %v678, %v695
        %vm697 = vcmp.gt.s32.totalorder %v679, %v695
        %vm698 = vcmp.gt.s32.totalorder %v680, %v695
        %vm699 = vcmp.gt.s32.totalorder %v681, %v695
        %vm700 = vcmp.gt.s32.totalorder %v682, %v695
        %vm701 = vcmp.gt.s32.totalorder %v683, %v695
        %vm702 = vcmp.gt.s32.totalorder %v684, %v695
        %vm703 = vcmp.gt.s32.totalorder %v685, %v695
        %vm704 = vcmp.gt.s32.totalorder %v686, %v695
        %vm705 = vcmp.gt.s32.totalorder %v687, %v695
        %vm706 = vcmp.gt.s32.totalorder %v688, %v695
        %vm707 = vcmp.gt.s32.totalorder %v689, %v695
        %vm708 = vcmp.gt.s32.totalorder %v690, %v695
        %vm709 = vcmp.gt.s32.totalorder %v691, %v695
        %vm710 = vcmp.gt.s32.totalorder %v692, %v695
        %vm711 = vcmp.gt.s32.totalorder %v693, %v695
        %v712 = vsel %vm696, 1, 0
        %v713 = vsel %vm697, 1, 0
        %v714 = vsel %vm698, 1, 0
        %v715 = vsel %vm699, 1, 0
        %v716 = vsel %vm700, 1, 0
        %v717 = vsel %vm701, 1, 0
        %v718 = vsel %vm702, 1, 0
        %v719 = vsel %vm703, 1, 0
        %v720 = vsel %vm704, 1, 0
        %v721 = vsel %vm705, 1, 0
        %v722 = vsel %vm706, 1, 0
        %v723 = vsel %vm707, 1, 0
        %v724 = vsel %vm708, 1, 0
        %v725 = vsel %vm709, 1, 0
        %v726 = vsel %vm710, 1, 0
        %v727 = vsel %vm711, 1, 0
        %v728 = vcvt.s32.f32 %v712
        %v729 = vcvt.s32.f32 %v713
        %v730 = vcvt.s32.f32 %v714
        %v731 = vcvt.s32.f32 %v715
        %v732 = vcvt.s32.f32 %v716
        %v733 = vcvt.s32.f32 %v717
        %v734 = vcvt.s32.f32 %v718
        %v735 = vcvt.s32.f32 %v719
        %v736 = vcvt.s32.f32 %v720
        %v737 = vcvt.s32.f32 %v721
        %v738 = vcvt.s32.f32 %v722
        %v739 = vcvt.s32.f32 %v723
        %v740 = vcvt.s32.f32 %v724
        %v741 = vcvt.s32.f32 %v725
        %v742 = vcvt.s32.f32 %v726
        %v743 = vcvt.s32.f32 %v727
        %745 = vset.pattern.permute.xlu0 0
        %746 = vperm.xlu0 %745, %v642
        %v747 = vpop.permute.xlu0 %746
        %750 = vset.pattern.permute.xlu0 0
        %751 = vperm.xlu0 %750, %v643
        %v752 = vpop.permute.xlu0 %751
        %755 = vset.pattern.permute.xlu0 0
        %756 = vperm.xlu0 %755, %v644
        %v757 = vpop.permute.xlu0 %756
        %760 = vset.pattern.permute.xlu0 0
        %761 = vperm.xlu0 %760, %v645
        %v762 = vpop.permute.xlu0 %761
        %765 = vset.pattern.permute.xlu0 0
        %766 = vperm.xlu0 %765, %v646
        %v767 = vpop.permute.xlu0 %766
        %770 = vset.pattern.permute.xlu0 0
        %771 = vperm.xlu0 %770, %v647
        %v772 = vpop.permute.xlu0 %771
        %775 = vset.pattern.permute.xlu0 0
        %776 = vperm.xlu0 %775, %v648
        %v777 = vpop.permute.xlu0 %776
        %780 = vset.pattern.permute.xlu0 0
        %781 = vperm.xlu0 %780, %v649
        %v782 = vpop.permute.xlu0 %781
        %785 = vset.pattern.permute.xlu0 0
        %786 = vperm.xlu0 %785, %v650
        %v787 = vpop.permute.xlu0 %786
        %790 = vset.pattern.permute.xlu0 0
        %791 = vperm.xlu0 %790, %v651
        %v792 = vpop.permute.xlu0 %791
        %795 = vset.pattern.permute.xlu0 0
        %796 = vperm.xlu0 %795, %v652
        %v797 = vpop.permute.xlu0 %796
        %800 = vset.pattern.permute.xlu0 0
        %801 = vperm.xlu0 %800, %v653
        %v802 = vpop.permute.xlu0 %801
        %805 = vset.pattern.permute.xlu0 0
        %806 = vperm.xlu0 %805, %v654
        %v807 = vpop.permute.xlu0 %806
        %810 = vset.pattern.permute.xlu0 0
        %811 = vperm.xlu0 %810, %v655
        %v812 = vpop.permute.xlu0 %811
        %815 = vset.pattern.permute.xlu0 0
        %816 = vperm.xlu0 %815, %v656
        %v817 = vpop.permute.xlu0 %816
        %820 = vset.pattern.permute.xlu0 0
        %821 = vperm.xlu0 %820, %v657
        %v822 = vpop.permute.xlu0 %821
        %v825 = vlaneseq
        %v826 = vshrl.u32 %v825, 7
        %v827 = vsub.s32 0, %v826
        %v828 = vrot.slane %v658, %v827
        %v830 = vmul.f32 %v747, %v828
        %v831 = vmul.f32 %v752, %v828
        %v832 = vmul.f32 %v757, %v828
        %v833 = vmul.f32 %v762, %v828
        %v834 = vmul.f32 %v767, %v828
        %v835 = vmul.f32 %v772, %v828
        %v836 = vmul.f32 %v777, %v828
        %v837 = vmul.f32 %v782, %v828
        %v838 = vmul.f32 %v787, %v828
        %v839 = vmul.f32 %v792, %v828
        %v840 = vmul.f32 %v797, %v828
        %v841 = vmul.f32 %v802, %v828
        %v842 = vmul.f32 %v807, %v828
        %v843 = vmul.f32 %v812, %v828
        %v844 = vmul.f32 %v817, %v828
        %v845 = vmul.f32 %v822, %v828
        %v846 = vsub.f32 1.0, %v642
        %v847 = vsub.f32 1.0, %v643
        %v848 = vsub.f32 1.0, %v644
        %v849 = vsub.f32 1.0, %v645
        %v850 = vsub.f32 1.0, %v646
        %v851 = vsub.f32 1.0, %v647
        %v852 = vsub.f32 1.0, %v648
        %v853 = vsub.f32 1.0, %v649
        %v854 = vsub.f32 1.0, %v650
        %v855 = vsub.f32 1.0, %v651
        %v856 = vsub.f32 1.0, %v652
        %v857 = vsub.f32 1.0, %v653
        %v858 = vsub.f32 1.0, %v654
        %v859 = vsub.f32 1.0, %v655
        %v860 = vsub.f32 1.0, %v656
        %v861 = vsub.f32 1.0, %v657
        %863 = vset.pattern.permute.xlu0 0
        %864 = vperm.xlu0 %863, %v846
        %v865 = vpop.permute.xlu0 %864
        %868 = vset.pattern.permute.xlu0 0
        %869 = vperm.xlu0 %868, %v847
        %v870 = vpop.permute.xlu0 %869
        %873 = vset.pattern.permute.xlu0 0
        %874 = vperm.xlu0 %873, %v848
        %v875 = vpop.permute.xlu0 %874
        %878 = vset.pattern.permute.xlu0 0
        %879 = vperm.xlu0 %878, %v849
        %v880 = vpop.permute.xlu0 %879
        %883 = vset.pattern.permute.xlu0 0
        %884 = vperm.xlu0 %883, %v850
        %v885 = vpop.permute.xlu0 %884
        %888 = vset.pattern.permute.xlu0 0
        %889 = vperm.xlu0 %888, %v851
        %v890 = vpop.permute.xlu0 %889
        %893 = vset.pattern.permute.xlu0 0
        %894 = vperm.xlu0 %893, %v852
        %v895 = vpop.permute.xlu0 %894
        %898 = vset.pattern.permute.xlu0 0
        %899 = vperm.xlu0 %898, %v853
        %v900 = vpop.permute.xlu0 %899
        %903 = vset.pattern.permute.xlu0 0
        %904 = vperm.xlu0 %903, %v854
        %v905 = vpop.permute.xlu0 %904
        %908 = vset.pattern.permute.xlu0 0
        %909 = vperm.xlu0 %908, %v855
        %v910 = vpop.permute.xlu0 %909
        %913 = vset.pattern.permute.xlu0 0
        %914 = vperm.xlu0 %913, %v856
        %v915 = vpop.permute.xlu0 %914
        %918 = vset.pattern.permute.xlu0 0
        %919 = vperm.xlu0 %918, %v857
        %v920 = vpop.permute.xlu0 %919
        %923 = vset.pattern.permute.xlu0 0
        %924 = vperm.xlu0 %923, %v858
        %v925 = vpop.permute.xlu0 %924
        %928 = vset.pattern.permute.xlu0 0
        %929 = vperm.xlu0 %928, %v859
        %v930 = vpop.permute.xlu0 %929
        %933 = vset.pattern.permute.xlu0 0
        %934 = vperm.xlu0 %933, %v860
        %v935 = vpop.permute.xlu0 %934
        %938 = vset.pattern.permute.xlu0 0
        %939 = vperm.xlu0 %938, %v861
        %v940 = vpop.permute.xlu0 %939
        %v942 = vmul.f32 %v865, %v828
        %v943 = vmul.f32 %v870, %v828
        %v944 = vmul.f32 %v875, %v828
        %v945 = vmul.f32 %v880, %v828
        %v946 = vmul.f32 %v885, %v828
        %v947 = vmul.f32 %v890, %v828
        %v948 = vmul.f32 %v895, %v828
        %v949 = vmul.f32 %v900, %v828
        %v950 = vmul.f32 %v905, %v828
        %v951 = vmul.f32 %v910, %v828
        %v952 = vmul.f32 %v915, %v828
        %v953 = vmul.f32 %v920, %v828
        %v954 = vmul.f32 %v925, %v828
        %v955 = vmul.f32 %v930, %v828
        %v956 = vmul.f32 %v935, %v828
        %v957 = vmul.f32 %v940, %v828
        %v958 = vsub.f32 1.0, %v658
        %v960 = vlaneseq
        %v961 = vshrl.u32 %v960, 7
        %v962 = vsub.s32 0, %v961
        %v963 = vrot.slane %v958, %v962
        %v965 = vadd.f32 %v942, %v963
        %v966 = vadd.f32 %v943, %v963
        %v967 = vadd.f32 %v944, %v963
        %v968 = vadd.f32 %v945, %v963
        %v969 = vadd.f32 %v946, %v963
        %v970 = vadd.f32 %v947, %v963
        %v971 = vadd.f32 %v948, %v963
        %v972 = vadd.f32 %v949, %v963
        %v973 = vadd.f32 %v950, %v963
        %v974 = vadd.f32 %v951, %v963
        %v975 = vadd.f32 %v952, %v963
        %v976 = vadd.f32 %v953, %v963
        %v977 = vadd.f32 %v954, %v963
        %v978 = vadd.f32 %v955, %v963
        %v979 = vadd.f32 %v956, %v963
        %v980 = vadd.f32 %v957, %v963
        %v981 = vmul.f32 %v965, -1e+12
        %v982 = vmul.f32 %v966, -1e+12
        %v983 = vmul.f32 %v967, -1e+12
        %v984 = vmul.f32 %v968, -1e+12
        %v985 = vmul.f32 %v969, -1e+12
        %v986 = vmul.f32 %v970, -1e+12
        %v987 = vmul.f32 %v971, -1e+12
        %v988 = vmul.f32 %v972, -1e+12
        %v989 = vmul.f32 %v973, -1e+12
        %v990 = vmul.f32 %v974, -1e+12
        %v991 = vmul.f32 %v975, -1e+12
        %v992 = vmul.f32 %v976, -1e+12
        %v993 = vmul.f32 %v977, -1e+12
        %v994 = vmul.f32 %v978, -1e+12
        %v995 = vmul.f32 %v979, -1e+12
        %v996 = vmul.f32 %v980, -1e+12
        %v997 = vmul.f32 %v728, 1e+12
        %v998 = vmul.f32 %v729, 1e+12
        %v999 = vmul.f32 %v730, 1e+12
        %v1000 = vmul.f32 %v731, 1e+12
        %v1001 = vmul.f32 %v732, 1e+12
        %v1002 = vmul.f32 %v733, 1e+12
        %v1003 = vmul.f32 %v734, 1e+12
        %v1004 = vmul.f32 %v735, 1e+12
        %v1005 = vmul.f32 %v736, 1e+12
        %v1006 = vmul.f32 %v737, 1e+12
        %v1007 = vmul.f32 %v738, 1e+12
        %v1008 = vmul.f32 %v739, 1e+12
        %v1009 = vmul.f32 %v740, 1e+12
        %v1010 = vmul.f32 %v741, 1e+12
        %v1011 = vmul.f32 %v742, 1e+12
        %v1012 = vmul.f32 %v743, 1e+12
        %v1013 = vsub.f32 %v981, %v997
        %v1014 = vsub.f32 %v982, %v998
        %v1015 = vsub.f32 %v983, %v999
        %v1016 = vsub.f32 %v984, %v1000
        %v1017 = vsub.f32 %v985, %v1001
        %v1018 = vsub.f32 %v986, %v1002
        %v1019 = vsub.f32 %v987, %v1003
        %v1020 = vsub.f32 %v988, %v1004
        %v1021 = vsub.f32 %v989, %v1005
        %v1022 = vsub.f32 %v990, %v1006
        %v1023 = vsub.f32 %v991, %v1007
        %v1024 = vsub.f32 %v992, %v1008
        %v1025 = vsub.f32 %v993, %v1009
        %v1026 = vsub.f32 %v994, %v1010
        %v1027 = vsub.f32 %v995, %v1011
        %v1028 = vsub.f32 %v996, %v1012
        %v1029 = vmul.f32 %v626, %v830
        %v1030 = vmul.f32 %v627, %v831
        %v1031 = vmul.f32 %v628, %v832
        %v1032 = vmul.f32 %v629, %v833
        %v1033 = vmul.f32 %v630, %v834
        %v1034 = vmul.f32 %v631, %v835
        %v1035 = vmul.f32 %v632, %v836
        %v1036 = vmul.f32 %v633, %v837
        %v1037 = vmul.f32 %v634, %v838
        %v1038 = vmul.f32 %v635, %v839
        %v1039 = vmul.f32 %v636, %v840
        %v1040 = vmul.f32 %v637, %v841
        %v1041 = vmul.f32 %v638, %v842
        %v1042 = vmul.f32 %v639, %v843
        %v1043 = vmul.f32 %v640, %v844
        %v1044 = vmul.f32 %v641, %v845
        %v1045 = vadd.f32 %v1029, %v1013
        %v1046 = vadd.f32 %v1030, %v1014
        %v1047 = vadd.f32 %v1031, %v1015
        %v1048 = vadd.f32 %v1032, %v1016
        %v1049 = vadd.f32 %v1033, %v1017
        %v1050 = vadd.f32 %v1034, %v1018
        %v1051 = vadd.f32 %v1035, %v1019
        %v1052 = vadd.f32 %v1036, %v1020
        %v1053 = vadd.f32 %v1037, %v1021
        %v1054 = vadd.f32 %v1038, %v1022
        %v1055 = vadd.f32 %v1039, %v1023
        %v1056 = vadd.f32 %v1040, %v1024
        %v1057 = vadd.f32 %v1041, %v1025
        %v1058 = vadd.f32 %v1042, %v1026
        %v1059 = vadd.f32 %v1043, %v1027
        %v1060 = vadd.f32 %v1044, %v1028
        %v1061 = vld [vmem:[%s388] sm:$0x1]
        %v1062 = vld [vmem:[%s397] sm:$0xff]
        %v1063 = vld [vmem:[%s397 + $0x8] sm:$0xff]
        %v1064 = vld [vmem:[%s397 + $0x10] sm:$0xff]
        %v1065 = vld [vmem:[%s397 + $0x18] sm:$0xff]
        %v1066 = vld [vmem:[%s397 + $0x20] sm:$0xff]
        %v1067 = vld [vmem:[%s397 + $0x28] sm:$0xff]
        %v1068 = vld [vmem:[%s397 + $0x30] sm:$0xff]
        %v1069 = vld [vmem:[%s397 + $0x38] sm:$0xff]
        %v1070 = vld [vmem:[%s397 + $0x40] sm:$0xff]
        %v1071 = vld [vmem:[%s397 + $0x48] sm:$0xff]
        %v1072 = vld [vmem:[%s397 + $0x50] sm:$0xff]
        %v1073 = vld [vmem:[%s397 + $0x58] sm:$0xff]
        %v1074 = vld [vmem:[%s397 + $0x60] sm:$0xff]
        %v1075 = vld [vmem:[%s397 + $0x68] sm:$0xff]
        %v1076 = vld [vmem:[%s397 + $0x70] sm:$0xff]
        %v1077 = vld [vmem:[%s397 + $0x78] sm:$0xff]
        %v1078 = vlaneseq
        %v1079 = vshrl.u32 %v1078, 7
        %v1080 = vsub.s32 0, %v1079
        %v1081 = vrot.slane %v1061, %v1080
        %1083 = vset.pattern.permute.xlu0 0
        %1084 = vperm.xlu0 %1083, %v1062
        %v1085 = vpop.permute.xlu0 %1084
        %1088 = vset.pattern.permute.xlu0 0
        %1089 = vperm.xlu0 %1088, %v1063
        %v1090 = vpop.permute.xlu0 %1089
        %1093 = vset.pattern.permute.xlu0 0
        %1094 = vperm.xlu0 %1093, %v1064
        %v1095 = vpop.permute.xlu0 %1094
        %1098 = vset.pattern.permute.xlu0 0
        %1099 = vperm.xlu0 %1098, %v1065
        %v1100 = vpop.permute.xlu0 %1099
        %1103 = vset.pattern.permute.xlu0 0
        %1104 = vperm.xlu0 %1103, %v1066
        %v1105 = vpop.permute.xlu0 %1104
        %1108 = vset.pattern.permute.xlu0 0
        %1109 = vperm.xlu0 %1108, %v1067
        %v1110 = vpop.permute.xlu0 %1109
        %1113 = vset.pattern.permute.xlu0 0
        %1114 = vperm.xlu0 %1113, %v1068
        %v1115 = vpop.permute.xlu0 %1114
        %1118 = vset.pattern.permute.xlu0 0
        %1119 = vperm.xlu0 %1118, %v1069
        %v1120 = vpop.permute.xlu0 %1119
        %1123 = vset.pattern.permute.xlu0 0
        %1124 = vperm.xlu0 %1123, %v1070
        %v1125 = vpop.permute.xlu0 %1124
        %1128 = vset.pattern.permute.xlu0 0
        %1129 = vperm.xlu0 %1128, %v1071
        %v1130 = vpop.permute.xlu0 %1129
        %1133 = vset.pattern.permute.xlu0 0
        %1134 = vperm.xlu0 %1133, %v1072
        %v1135 = vpop.permute.xlu0 %1134
        %1138 = vset.pattern.permute.xlu0 0
        %1139 = vperm.xlu0 %1138, %v1073
        %v1140 = vpop.permute.xlu0 %1139
        %1143 = vset.pattern.permute.xlu0 0
        %1144 = vperm.xlu0 %1143, %v1074
        %v1145 = vpop.permute.xlu0 %1144
        %1148 = vset.pattern.permute.xlu0 0
        %1149 = vperm.xlu0 %1148, %v1075
        %v1150 = vpop.permute.xlu0 %1149
        %1153 = vset.pattern.permute.xlu0 0
        %1154 = vperm.xlu0 %1153, %v1076
        %v1155 = vpop.permute.xlu0 %1154
        %1158 = vset.pattern.permute.xlu0 0
        %1159 = vperm.xlu0 %1158, %v1077
        %v1160 = vpop.permute.xlu0 %1159
        %v1162 = vadd.f32 %v1081, %v1085
        %v1163 = vadd.f32 %v1081, %v1090
        %v1164 = vadd.f32 %v1081, %v1095
        %v1165 = vadd.f32 %v1081, %v1100
        %v1166 = vadd.f32 %v1081, %v1105
        %v1167 = vadd.f32 %v1081, %v1110
        %v1168 = vadd.f32 %v1081, %v1115
        %v1169 = vadd.f32 %v1081, %v1120
        %v1170 = vadd.f32 %v1081, %v1125
        %v1171 = vadd.f32 %v1081, %v1130
        %v1172 = vadd.f32 %v1081, %v1135
        %v1173 = vadd.f32 %v1081, %v1140
        %v1174 = vadd.f32 %v1081, %v1145
        %v1175 = vadd.f32 %v1081, %v1150
        %v1176 = vadd.f32 %v1081, %v1155
        %v1177 = vadd.f32 %v1081, %v1160
        %v1178 = vmul.f32 %v1162, %v830
        %v1179 = vmul.f32 %v1163, %v831
        %v1180 = vmul.f32 %v1164, %v832
        %v1181 = vmul.f32 %v1165, %v833
        %v1182 = vmul.f32 %v1166, %v834
        %v1183 = vmul.f32 %v1167, %v835
        %v1184 = vmul.f32 %v1168, %v836
        %v1185 = vmul.f32 %v1169, %v837
        %v1186 = vmul.f32 %v1170, %v838
        %v1187 = vmul.f32 %v1171, %v839
        %v1188 = vmul.f32 %v1172, %v840
        %v1189 = vmul.f32 %v1173, %v841
        %v1190 = vmul.f32 %v1174, %v842
        %v1191 = vmul.f32 %v1175, %v843
        %v1192 = vmul.f32 %v1176, %v844
        %v1193 = vmul.f32 %v1177, %v845
        %v1194 = vadd.f32 %v1045, %v1178
        %v1195 = vadd.f32 %v1046, %v1179
        %v1196 = vadd.f32 %v1047, %v1180
        %v1197 = vadd.f32 %v1048, %v1181
        %v1198 = vadd.f32 %v1049, %v1182
        %v1199 = vadd.f32 %v1050, %v1183
        %v1200 = vadd.f32 %v1051, %v1184
        %v1201 = vadd.f32 %v1052, %v1185
        %v1202 = vadd.f32 %v1053, %v1186
        %v1203 = vadd.f32 %v1054, %v1187
        %v1204 = vadd.f32 %v1055, %v1188
        %v1205 = vadd.f32 %v1056, %v1189
        %v1206 = vadd.f32 %v1057, %v1190
        %v1207 = vadd.f32 %v1058, %v1191
        %v1208 = vadd.f32 %v1059, %v1192
        %v1209 = vadd.f32 %v1060, %v1193
        %1210 = vst [vmem:[%s369] sm:$0xff] %v1194
        %1211 = vst [vmem:[%s369 + $0x8] sm:$0xff] %v1195
        %1212 = vst [vmem:[%s369 + $0x10] sm:$0xff] %v1196
        %1213 = vst [vmem:[%s369 + $0x18] sm:$0xff] %v1197
        %1214 = vst [vmem:[%s369 + $0x20] sm:$0xff] %v1198
        %1215 = vst [vmem:[%s369 + $0x28] sm:$0xff] %v1199
        %1216 = vst [vmem:[%s369 + $0x30] sm:$0xff] %v1200
        %1217 = vst [vmem:[%s369 + $0x38] sm:$0xff] %v1201
        %1218 = vst [vmem:[%s369 + $0x40] sm:$0xff] %v1202
        %1219 = vst [vmem:[%s369 + $0x48] sm:$0xff] %v1203
        %1220 = vst [vmem:[%s369 + $0x50] sm:$0xff] %v1204
        %1221 = vst [vmem:[%s369 + $0x58] sm:$0xff] %v1205
        %1222 = vst [vmem:[%s369 + $0x60] sm:$0xff] %v1206
        %1223 = vst [vmem:[%s369 + $0x68] sm:$0xff] %v1207
        %1224 = vst [vmem:[%s369 + $0x70] sm:$0xff] %v1208
        %1225 = vst [vmem:[%s369 + $0x78] sm:$0xff] %v1209
        %v1226 = vld [vmem:[%s388 + $0x1] sm:$0x1]
        %v1227 = vld [vmem:[%s397] sm:$0xff]
        %v1228 = vld [vmem:[%s397 + $0x8] sm:$0xff]
        %v1229 = vld [vmem:[%s397 + $0x10] sm:$0xff]
        %v1230 = vld [vmem:[%s397 + $0x18] sm:$0xff]
        %v1231 = vld [vmem:[%s397 + $0x20] sm:$0xff]
        %v1232 = vld [vmem:[%s397 + $0x28] sm:$0xff]
        %v1233 = vld [vmem:[%s397 + $0x30] sm:$0xff]
        %v1234 = vld [vmem:[%s397 + $0x38] sm:$0xff]
        %v1235 = vld [vmem:[%s397 + $0x40] sm:$0xff]
        %v1236 = vld [vmem:[%s397 + $0x48] sm:$0xff]
        %v1237 = vld [vmem:[%s397 + $0x50] sm:$0xff]
        %v1238 = vld [vmem:[%s397 + $0x58] sm:$0xff]
        %v1239 = vld [vmem:[%s397 + $0x60] sm:$0xff]
        %v1240 = vld [vmem:[%s397 + $0x68] sm:$0xff]
        %v1241 = vld [vmem:[%s397 + $0x70] sm:$0xff]
        %v1242 = vld [vmem:[%s397 + $0x78] sm:$0xff]
        %v1243 = vlaneseq
        %v1244 = vshrl.u32 %v1243, 7
        %v1245 = vsub.s32 0, %v1244
        %v1246 = vrot.slane %v1226, %v1245
        %1248 = vset.pattern.permute.xlu0 1
        %1249 = vperm.xlu0 %1248, %v1227
        %v1250 = vpop.permute.xlu0 %1249
        %1253 = vset.pattern.permute.xlu0 1
        %1254 = vperm.xlu0 %1253, %v1228
        %v1255 = vpop.permute.xlu0 %1254
        %1258 = vset.pattern.permute.xlu0 1
        %1259 = vperm.xlu0 %1258, %v1229
        %v1260 = vpop.permute.xlu0 %1259
        %1263 = vset.pattern.permute.xlu0 1
        %1264 = vperm.xlu0 %1263, %v1230
        %v1265 = vpop.permute.xlu0 %1264
        %1268 = vset.pattern.permute.xlu0 1
        %1269 = vperm.xlu0 %1268, %v1231
        %v1270 = vpop.permute.xlu0 %1269
        %1273 = vset.pattern.permute.xlu0 1
        %1274 = vperm.xlu0 %1273, %v1232
        %v1275 = vpop.permute.xlu0 %1274
        %1278 = vset.pattern.permute.xlu0 1
        %1279 = vperm.xlu0 %1278, %v1233
        %v1280 = vpop.permute.xlu0 %1279
        %1283 = vset.pattern.permute.xlu0 1
        %1284 = vperm.xlu0 %1283, %v1234
        %v1285 = vpop.permute.xlu0 %1284
        %1288 = vset.pattern.permute.xlu0 1
        %1289 = vperm.xlu0 %1288, %v1235
        %v1290 = vpop.permute.xlu0 %1289
        %1293 = vset.pattern.permute.xlu0 1
        %1294 = vperm.xlu0 %1293, %v1236
        %v1295 = vpop.permute.xlu0 %1294
        %1298 = vset.pattern.permute.xlu0 1
        %1299 = vperm.xlu0 %1298, %v1237
        %v1300 = vpop.permute.xlu0 %1299
        %1303 = vset.pattern.permute.xlu0 1
        %1304 = vperm.xlu0 %1303, %v1238
        %v1305 = vpop.permute.xlu0 %1304
        %1308 = vset.pattern.permute.xlu0 1
        %1309 = vperm.xlu0 %1308, %v1239
        %v1310 = vpop.permute.xlu0 %1309
        %1313 = vset.pattern.permute.xlu0 1
        %1314 = vperm.xlu0 %1313, %v1240
        %v1315 = vpop.permute.xlu0 %1314
        %1318 = vset.pattern.permute.xlu0 1
        %1319 = vperm.xlu0 %1318, %v1241
        %v1320 = vpop.permute.xlu0 %1319
        %1323 = vset.pattern.permute.xlu0 1
        %1324 = vperm.xlu0 %1323, %v1242
        %v1325 = vpop.permute.xlu0 %1324
        %v1327 = vadd.f32 %v1246, %v1250
        %v1328 = vadd.f32 %v1246, %v1255
        %v1329 = vadd.f32 %v1246, %v1260
        %v1330 = vadd.f32 %v1246, %v1265
        %v1331 = vadd.f32 %v1246, %v1270
        %v1332 = vadd.f32 %v1246, %v1275
        %v1333 = vadd.f32 %v1246, %v1280
        %v1334 = vadd.f32 %v1246, %v1285
        %v1335 = vadd.f32 %v1246, %v1290
        %v1336 = vadd.f32 %v1246, %v1295
        %v1337 = vadd.f32 %v1246, %v1300
        %v1338 = vadd.f32 %v1246, %v1305
        %v1339 = vadd.f32 %v1246, %v1310
        %v1340 = vadd.f32 %v1246, %v1315
        %v1341 = vadd.f32 %v1246, %v1320
        %v1342 = vadd.f32 %v1246, %v1325
        %v1343 = vmul.f32 %v1327, %v830
        %v1344 = vmul.f32 %v1328, %v831
        %v1345 = vmul.f32 %v1329, %v832
        %v1346 = vmul.f32 %v1330, %v833
        %v1347 = vmul.f32 %v1331, %v834
        %v1348 = vmul.f32 %v1332, %v835
        %v1349 = vmul.f32 %v1333, %v836
        %v1350 = vmul.f32 %v1334, %v837
        %v1351 = vmul.f32 %v1335, %v838
        %v1352 = vmul.f32 %v1336, %v839
        %v1353 = vmul.f32 %v1337, %v840
        %v1354 = vmul.f32 %v1338, %v841
        %v1355 = vmul.f32 %v1339, %v842
        %v1356 = vmul.f32 %v1340, %v843
        %v1357 = vmul.f32 %v1341, %v844
        %v1358 = vmul.f32 %v1342, %v845
        %v1359 = vadd.f32 %v1045, %v1343
        %v1360 = vadd.f32 %v1046, %v1344
        %v1361 = vadd.f32 %v1047, %v1345
        %v1362 = vadd.f32 %v1048, %v1346
        %v1363 = vadd.f32 %v1049, %v1347
        %v1364 = vadd.f32 %v1050, %v1348
        %v1365 = vadd.f32 %v1051, %v1349
        %v1366 = vadd.f32 %v1052, %v1350
        %v1367 = vadd.f32 %v1053, %v1351
        %v1368 = vadd.f32 %v1054, %v1352
        %v1369 = vadd.f32 %v1055, %v1353
        %v1370 = vadd.f32 %v1056, %v1354
        %v1371 = vadd.f32 %v1057, %v1355
        %v1372 = vadd.f32 %v1058, %v1356
        %v1373 = vadd.f32 %v1059, %v1357
        %v1374 = vadd.f32 %v1060, %v1358
        %s1375 = scalar_lea.vmem %s369, 128 [#allocation2]
        %1376 = vst [vmem:[%s1375] sm:$0xff] %v1359
        %1377 = vst [vmem:[%s1375 + $0x8] sm:$0xff] %v1360
        %1378 = vst [vmem:[%s1375 + $0x10] sm:$0xff] %v1361
        %1379 = vst [vmem:[%s1375 + $0x18] sm:$0xff] %v1362
        %1380 = vst [vmem:[%s1375 + $0x20] sm:$0xff] %v1363
        %1381 = vst [vmem:[%s1375 + $0x28] sm:$0xff] %v1364
        %1382 = vst [vmem:[%s1375 + $0x30] sm:$0xff] %v1365
        %1383 = vst [vmem:[%s1375 + $0x38] sm:$0xff] %v1366
        %1384 = vst [vmem:[%s1375 + $0x40] sm:$0xff] %v1367
        %1385 = vst [vmem:[%s1375 + $0x48] sm:$0xff] %v1368
        %1386 = vst [vmem:[%s1375 + $0x50] sm:$0xff] %v1369
        %1387 = vst [vmem:[%s1375 + $0x58] sm:$0xff] %v1370
        %1388 = vst [vmem:[%s1375 + $0x60] sm:$0xff] %v1371
        %1389 = vst [vmem:[%s1375 + $0x68] sm:$0xff] %v1372
        %1390 = vst [vmem:[%s1375 + $0x70] sm:$0xff] %v1373
        %1391 = vst [vmem:[%s1375 + $0x78] sm:$0xff] %v1374
        %v1392 = vld [vmem:[%s388 + $0x2] sm:$0x1]
        %v1393 = vld [vmem:[%s397] sm:$0xff]
        %v1394 = vld [vmem:[%s397 + $0x8] sm:$0xff]
        %v1395 = vld [vmem:[%s397 + $0x10] sm:$0xff]
        %v1396 = vld [vmem:[%s397 + $0x18] sm:$0xff]
        %v1397 = vld [vmem:[%s397 + $0x20] sm:$0xff]
        %v1398 = vld [vmem:[%s397 + $0x28] sm:$0xff]
        %v1399 = vld [vmem:[%s397 + $0x30] sm:$0xff]
        %v1400 = vld [vmem:[%s397 + $0x38] sm:$0xff]
        %v1401 = vld [vmem:[%s397 + $0x40] sm:$0xff]
        %v1402 = vld [vmem:[%s397 + $0x48] sm:$0xff]
        %v1403 = vld [vmem:[%s397 + $0x50] sm:$0xff]
        %v1404 = vld [vmem:[%s397 + $0x58] sm:$0xff]
        %v1405 = vld [vmem:[%s397 + $0x60] sm:$0xff]
        %v1406 = vld [vmem:[%s397 + $0x68] sm:$0xff]
        %v1407 = vld [vmem:[%s397 + $0x70] sm:$0xff]
        %v1408 = vld [vmem:[%s397 + $0x78] sm:$0xff]
        %v1409 = vlaneseq
        %v1410 = vshrl.u32 %v1409, 7
        %v1411 = vsub.s32 0, %v1410
        %v1412 = vrot.slane %v1392, %v1411
        %1414 = vset.pattern.permute.xlu0 2
        %1415 = vperm.xlu0 %1414, %v1393
        %v1416 = vpop.permute.xlu0 %1415
        %1419 = vset.pattern.permute.xlu0 2
        %1420 = vperm.xlu0 %1419, %v1394
        %v1421 = vpop.permute.xlu0 %1420
        %1424 = vset.pattern.permute.xlu0 2
        %1425 = vperm.xlu0 %1424, %v1395
        %v1426 = vpop.permute.xlu0 %1425
        %1429 = vset.pattern.permute.xlu0 2
        %1430 = vperm.xlu0 %1429, %v1396
        %v1431 = vpop.permute.xlu0 %1430
        %1434 = vset.pattern.permute.xlu0 2
        %1435 = vperm.xlu0 %1434, %v1397
        %v1436 = vpop.permute.xlu0 %1435
        %1439 = vset.pattern.permute.xlu0 2
        %1440 = vperm.xlu0 %1439, %v1398
        %v1441 = vpop.permute.xlu0 %1440
        %1444 = vset.pattern.permute.xlu0 2
        %1445 = vperm.xlu0 %1444, %v1399
        %v1446 = vpop.permute.xlu0 %1445
        %1449 = vset.pattern.permute.xlu0 2
        %1450 = vperm.xlu0 %1449, %v1400
        %v1451 = vpop.permute.xlu0 %1450
        %1454 = vset.pattern.permute.xlu0 2
        %1455 = vperm.xlu0 %1454, %v1401
        %v1456 = vpop.permute.xlu0 %1455
        %1459 = vset.pattern.permute.xlu0 2
        %1460 = vperm.xlu0 %1459, %v1402
        %v1461 = vpop.permute.xlu0 %1460
        %1464 = vset.pattern.permute.xlu0 2
        %1465 = vperm.xlu0 %1464, %v1403
        %v1466 = vpop.permute.xlu0 %1465
        %1469 = vset.pattern.permute.xlu0 2
        %1470 = vperm.xlu0 %1469, %v1404
        %v1471 = vpop.permute.xlu0 %1470
        %1474 = vset.pattern.permute.xlu0 2
        %1475 = vperm.xlu0 %1474, %v1405
        %v1476 = vpop.permute.xlu0 %1475
        %1479 = vset.pattern.permute.xlu0 2
        %1480 = vperm.xlu0 %1479, %v1406
        %v1481 = vpop.permute.xlu0 %1480
        %1484 = vset.pattern.permute.xlu0 2
        %1485 = vperm.xlu0 %1484, %v1407
        %v1486 = vpop.permute.xlu0 %1485
        %1489 = vset.pattern.permute.xlu0 2
        %1490 = vperm.xlu0 %1489, %v1408
        %v1491 = vpop.permute.xlu0 %1490
        %v1493 = vadd.f32 %v1412, %v1416
        %v1494 = vadd.f32 %v1412, %v1421
        %v1495 = vadd.f32 %v1412, %v1426
        %v1496 = vadd.f32 %v1412, %v1431
        %v1497 = vadd.f32 %v1412, %v1436
        %v1498 = vadd.f32 %v1412, %v1441
        %v1499 = vadd.f32 %v1412, %v1446
        %v1500 = vadd.f32 %v1412, %v1451
        %v1501 = vadd.f32 %v1412, %v1456
        %v1502 = vadd.f32 %v1412, %v1461
        %v1503 = vadd.f32 %v1412, %v1466
        %v1504 = vadd.f32 %v1412, %v1471
        %v1505 = vadd.f32 %v1412, %v1476
        %v1506 = vadd.f32 %v1412, %v1481
        %v1507 = vadd.f32 %v1412, %v1486
        %v1508 = vadd.f32 %v1412, %v1491
        %v1509 = vmul.f32 %v1493, %v830
        %v1510 = vmul.f32 %v1494, %v831
        %v1511 = vmul.f32 %v1495, %v832
        %v1512 = vmul.f32 %v1496, %v833
        %v1513 = vmul.f32 %v1497, %v834
        %v1514 = vmul.f32 %v1498, %v835
        %v1515 = vmul.f32 %v1499, %v836
        %v1516 = vmul.f32 %v1500, %v837
        %v1517 = vmul.f32 %v1501, %v838
        %v1518 = vmul.f32 %v1502, %v839
        %v1519 = vmul.f32 %v1503, %v840
        %v1520 = vmul.f32 %v1504, %v841
        %v1521 = vmul.f32 %v1505, %v842
        %v1522 = vmul.f32 %v1506, %v843
        %v1523 = vmul.f32 %v1507, %v844
        %v1524 = vmul.f32 %v1508, %v845
        %v1525 = vadd.f32 %v1045, %v1509
        %v1526 = vadd.f32 %v1046, %v1510
        %v1527 = vadd.f32 %v1047, %v1511
        %v1528 = vadd.f32 %v1048, %v1512
        %v1529 = vadd.f32 %v1049, %v1513
        %v1530 = vadd.f32 %v1050, %v1514
        %v1531 = vadd.f32 %v1051, %v1515
        %v1532 = vadd.f32 %v1052, %v1516
        %v1533 = vadd.f32 %v1053, %v1517
        %v1534 = vadd.f32 %v1054, %v1518
        %v1535 = vadd.f32 %v1055, %v1519
        %v1536 = vadd.f32 %v1056, %v1520
        %v1537 = vadd.f32 %v1057, %v1521
        %v1538 = vadd.f32 %v1058, %v1522
        %v1539 = vadd.f32 %v1059, %v1523
        %v1540 = vadd.f32 %v1060, %v1524
        %s1541 = scalar_lea.vmem %s369, 256 [#allocation2]
        %1542 = vst [vmem:[%s1541] sm:$0xff] %v1525
        %1543 = vst [vmem:[%s1541 + $0x8] sm:$0xff] %v1526
        %1544 = vst [vmem:[%s1541 + $0x10] sm:$0xff] %v1527
        %1545 = vst [vmem:[%s1541 + $0x18] sm:$0xff] %v1528
        %1546 = vst [vmem:[%s1541 + $0x20] sm:$0xff] %v1529
        %1547 = vst [vmem:[%s1541 + $0x28] sm:$0xff] %v1530
        %1548 = vst [vmem:[%s1541 + $0x30] sm:$0xff] %v1531
        %1549 = vst [vmem:[%s1541 + $0x38] sm:$0xff] %v1532
        %1550 = vst [vmem:[%s1541 + $0x40] sm:$0xff] %v1533
        %1551 = vst [vmem:[%s1541 + $0x48] sm:$0xff] %v1534
        %1552 = vst [vmem:[%s1541 + $0x50] sm:$0xff] %v1535
        %1553 = vst [vmem:[%s1541 + $0x58] sm:$0xff] %v1536
        %1554 = vst [vmem:[%s1541 + $0x60] sm:$0xff] %v1537
        %1555 = vst [vmem:[%s1541 + $0x68] sm:$0xff] %v1538
        %1556 = vst [vmem:[%s1541 + $0x70] sm:$0xff] %v1539
        %1557 = vst [vmem:[%s1541 + $0x78] sm:$0xff] %v1540
        %v1558 = vld [vmem:[%s388 + $0x3] sm:$0x1]
        %v1559 = vld [vmem:[%s397] sm:$0xff]
        %v1560 = vld [vmem:[%s397 + $0x8] sm:$0xff]
        %v1561 = vld [vmem:[%s397 + $0x10] sm:$0xff]
        %v1562 = vld [vmem:[%s397 + $0x18] sm:$0xff]
        %v1563 = vld [vmem:[%s397 + $0x20] sm:$0xff]
        %v1564 = vld [vmem:[%s397 + $0x28] sm:$0xff]
        %v1565 = vld [vmem:[%s397 + $0x30] sm:$0xff]
        %v1566 = vld [vmem:[%s397 + $0x38] sm:$0xff]
        %v1567 = vld [vmem:[%s397 + $0x40] sm:$0xff]
        %v1568 = vld [vmem:[%s397 + $0x48] sm:$0xff]
        %v1569 = vld [vmem:[%s397 + $0x50] sm:$0xff]
        %v1570 = vld [vmem:[%s397 + $0x58] sm:$0xff]
        %v1571 = vld [vmem:[%s397 + $0x60] sm:$0xff]
        %v1572 = vld [vmem:[%s397 + $0x68] sm:$0xff]
        %v1573 = vld [vmem:[%s397 + $0x70] sm:$0xff]
        %v1574 = vld [vmem:[%s397 + $0x78] sm:$0xff]
        %v1575 = vlaneseq
        %v1576 = vshrl.u32 %v1575, 7
        %v1577 = vsub.s32 0, %v1576
        %v1578 = vrot.slane %v1558, %v1577
        %1580 = vset.pattern.permute.xlu0 3
        %1581 = vperm.xlu0 %1580, %v1559
        %v1582 = vpop.permute.xlu0 %1581
        %1585 = vset.pattern.permute.xlu0 3
        %1586 = vperm.xlu0 %1585, %v1560
        %v1587 = vpop.permute.xlu0 %1586
        %1590 = vset.pattern.permute.xlu0 3
        %1591 = vperm.xlu0 %1590, %v1561
        %v1592 = vpop.permute.xlu0 %1591
        %1595 = vset.pattern.permute.xlu0 3
        %1596 = vperm.xlu0 %1595, %v1562
        %v1597 = vpop.permute.xlu0 %1596
        %1600 = vset.pattern.permute.xlu0 3
        %1601 = vperm.xlu0 %1600, %v1563
        %v1602 = vpop.permute.xlu0 %1601
        %1605 = vset.pattern.permute.xlu0 3
        %1606 = vperm.xlu0 %1605, %v1564
        %v1607 = vpop.permute.xlu0 %1606
        %1610 = vset.pattern.permute.xlu0 3
        %1611 = vperm.xlu0 %1610, %v1565
        %v1612 = vpop.permute.xlu0 %1611
        %1615 = vset.pattern.permute.xlu0 3
        %1616 = vperm.xlu0 %1615, %v1566
        %v1617 = vpop.permute.xlu0 %1616
        %1620 = vset.pattern.permute.xlu0 3
        %1621 = vperm.xlu0 %1620, %v1567
        %v1622 = vpop.permute.xlu0 %1621
        %1625 = vset.pattern.permute.xlu0 3
        %1626 = vperm.xlu0 %1625, %v1568
        %v1627 = vpop.permute.xlu0 %1626
        %1630 = vset.pattern.permute.xlu0 3
        %1631 = vperm.xlu0 %1630, %v1569
        %v1632 = vpop.permute.xlu0 %1631
        %1635 = vset.pattern.permute.xlu0 3
        %1636 = vperm.xlu0 %1635, %v1570
        %v1637 = vpop.permute.xlu0 %1636
        %1640 = vset.pattern.permute.xlu0 3
        %1641 = vperm.xlu0 %1640, %v1571
        %v1642 = vpop.permute.xlu0 %1641
        %1645 = vset.pattern.permute.xlu0 3
        %1646 = vperm.xlu0 %1645, %v1572
        %v1647 = vpop.permute.xlu0 %1646
        %1650 = vset.pattern.permute.xlu0 3
        %1651 = vperm.xlu0 %1650, %v1573
        %v1652 = vpop.permute.xlu0 %1651
        %1655 = vset.pattern.permute.xlu0 3
        %1656 = vperm.xlu0 %1655, %v1574
        %v1657 = vpop.permute.xlu0 %1656
        %v1659 = vadd.f32 %v1578, %v1582
        %v1660 = vadd.f32 %v1578, %v1587
        %v1661 = vadd.f32 %v1578, %v1592
        %v1662 = vadd.f32 %v1578, %v1597
        %v1663 = vadd.f32 %v1578, %v1602
        %v1664 = vadd.f32 %v1578, %v1607
        %v1665 = vadd.f32 %v1578, %v1612
        %v1666 = vadd.f32 %v1578, %v1617
        %v1667 = vadd.f32 %v1578, %v1622
        %v1668 = vadd.f32 %v1578, %v1627
        %v1669 = vadd.f32 %v1578, %v1632
        %v1670 = vadd.f32 %v1578, %v1637
        %v1671 = vadd.f32 %v1578, %v1642
        %v1672 = vadd.f32 %v1578, %v1647
        %v1673 = vadd.f32 %v1578, %v1652
        %v1674 = vadd.f32 %v1578, %v1657
        %v1675 = vmul.f32 %v1659, %v830
        %v1676 = vmul.f32 %v1660, %v831
        %v1677 = vmul.f32 %v1661, %v832
        %v1678 = vmul.f32 %v1662, %v833
        %v1679 = vmul.f32 %v1663, %v834
        %v1680 = vmul.f32 %v1664, %v835
        %v1681 = vmul.f32 %v1665, %v836
        %v1682 = vmul.f32 %v1666, %v837
        %v1683 = vmul.f32 %v1667, %v838
        %v1684 = vmul.f32 %v1668, %v839
        %v1685 = vmul.f32 %v1669, %v840
        %v1686 = vmul.f32 %v1670, %v841
        %v1687 = vmul.f32 %v1671, %v842
        %v1688 = vmul.f32 %v1672, %v843
        %v1689 = vmul.f32 %v1673, %v844
        %v1690 = vmul.f32 %v1674, %v845
        %v1691 = vadd.f32 %v1045, %v1675
        %v1692 = vadd.f32 %v1046, %v1676
        %v1693 = vadd.f32 %v1047, %v1677
        %v1694 = vadd.f32 %v1048, %v1678
        %v1695 = vadd.f32 %v1049, %v1679
        %v1696 = vadd.f32 %v1050, %v1680
        %v1697 = vadd.f32 %v1051, %v1681
        %v1698 = vadd.f32 %v1052, %v1682
        %v1699 = vadd.f32 %v1053, %v1683
        %v1700 = vadd.f32 %v1054, %v1684
        %v1701 = vadd.f32 %v1055, %v1685
        %v1702 = vadd.f32 %v1056, %v1686
        %v1703 = vadd.f32 %v1057, %v1687
        %v1704 = vadd.f32 %v1058, %v1688
        %v1705 = vadd.f32 %v1059, %v1689
        %v1706 = vadd.f32 %v1060, %v1690
        %s1707 = scalar_lea.vmem %s369, 384 [#allocation2]
        %1708 = vst [vmem:[%s1707] sm:$0xff] %v1691
        %1709 = vst [vmem:[%s1707 + $0x8] sm:$0xff] %v1692
        %1710 = vst [vmem:[%s1707 + $0x10] sm:$0xff] %v1693
        %1711 = vst [vmem:[%s1707 + $0x18] sm:$0xff] %v1694
        %1712 = vst [vmem:[%s1707 + $0x20] sm:$0xff] %v1695
        %1713 = vst [vmem:[%s1707 + $0x28] sm:$0xff] %v1696
        %1714 = vst [vmem:[%s1707 + $0x30] sm:$0xff] %v1697
        %1715 = vst [vmem:[%s1707 + $0x38] sm:$0xff] %v1698
        %1716 = vst [vmem:[%s1707 + $0x40] sm:$0xff] %v1699
        %1717 = vst [vmem:[%s1707 + $0x48] sm:$0xff] %v1700
        %1718 = vst [vmem:[%s1707 + $0x50] sm:$0xff] %v1701
        %1719 = vst [vmem:[%s1707 + $0x58] sm:$0xff] %v1702
        %1720 = vst [vmem:[%s1707 + $0x60] sm:$0xff] %v1703
        %1721 = vst [vmem:[%s1707 + $0x68] sm:$0xff] %v1704
        %1722 = vst [vmem:[%s1707 + $0x70] sm:$0xff] %v1705
        %1723 = vst [vmem:[%s1707 + $0x78] sm:$0xff] %v1706
        %s1724 = sand.u32 %s213, 1
        %s1725 = scalar_lea.sflag [#allocation3], %s1724
        %s1726 = sand.u32 %s213, 1
        %s1727 = smul.addr %s1726, 512
        %s1728 = scalar_lea.vmem [#allocation2], %s1727
        // Predicated region
        $region45: #{tpu_custom_call.1} parent=43 // pred_check
          %p1729 = pneg %p223
        $region46: #{tpu_custom_call.1} parent=43 // pred_check_branch
          %1731 = sbr.rel (%p1729) target = $region48
        $region47: #{tpu_custom_call.1} parent=43 // pred_region
          %s1732 = smul.u32 4, %s26
          %s1733 = smul.u32 16, %s27
          %s1735 = ssub.s32 8192, 8192
          %1736 = vsyncadd %s1725, %s1735
          %s1737 = smul.addr %s1732, 16
          %s1738 = sadd.s32 %s1733, %s1737
          %s1739 = smul.addr %s25, 64
          %s1740 = sadd.s32 %s1738, %s1739
          %s1741 = smul.addr %s1740, 128
          %s1742 = scalar_lea.hbm %s6, %s1741
          %s1743 = sshll.u32 %s1728, 4
          %s1744 = int_to_ptr.vmem [resolvable:$true] %s1743
          %1749 = dma.vmem_to_hbm [thread:$0]  %s1744, 8192, %s1742, %s1725, 128, 128, 8
        $region48: #{tpu_custom_call.1} parent=43 // pred_fallthru
          _
      $region44: #{tpu_custom_call.1} parent=5 // pred_fallthru
        _
      %p1750 = scmp.le.s32.totalorder 2, %s15
      // Predicated region
      $region49: #{tpu_custom_call.1} parent=5 // pred_check
        %p1751 = pneg %p1750
      $region50: #{tpu_custom_call.1} parent=5 // pred_check_branch
        %1753 = sbr.rel (%p1751) target = $region52
      $region51: #{tpu_custom_call.1} parent=5 // pred_region
        %s1754 = ssub.s32 %s15, 2
        // Predicated region
        $region53: #{tpu_custom_call.1} parent=51 // pred_check
          %p1755 = pneg %p229
        $region54: #{tpu_custom_call.1} parent=51 // pred_check_branch
          %1757 = sbr.rel (%p1755) target = $region56
        $region55: #{tpu_custom_call.1} parent=51 // pred_region
          %s1758 = sand.u32 %s214, 1
          %s1759 = scalar_lea.sflag [#allocation3], %s1758
          %s1760 = sand.u32 %s214, 1
          %s1761 = smul.addr %s1760, 512
          %s1762 = scalar_lea.vmem [#allocation2], %s1761
          %1763 = dma.done %s1759, 8192
        $region56: #{tpu_custom_call.1} parent=51 // pred_fallthru
          _
      $region52: #{tpu_custom_call.1} parent=5 // pred_fallthru
        _
    $region6: #{tpu_custom_call.1} parent=1 // loop_footer
      %s19 = sadd.s32 1, %s15
    $region7: #{tpu_custom_call.1} parent=1 // loop_footer_branch
      %14 = sbr.rel target = $region3
    $region8: #{tpu_custom_call.1} parent=1 // loop_exit
      _
    %1764 = vsyncpa [#allocation3], 1
    %s1765 = scalar_lea.sflag [#allocation3], 1
    %1766 = vsyncpa %s1765, 1

</llo_original>
